<compile_context>
chip_gen: v7x
topology: tpu7x:2x2x1
jax: 0.10.0
libtpu: 0.0.40
codegen_flags: <defaults>
</compile_context>

<pallas_src>
import jax
import jax.numpy as jnp
from jax import lax
from jax.experimental import pallas as pl
from jax.experimental.pallas import tpu as pltpu


VMEM_SPEC = pl.BlockSpec(memory_space=pltpu.MemorySpace.VMEM)
_F32 = jnp.float32


# --------------------------- fused forward kernel ---------------------------

def _gcm_fused_kernel(
    dia_ref,        # [B, T, 4H]   dialogue features (drnn input)
    v_ref,          # [B, 2H]      batch_video (frames dim squeezed)
    q_ref,          # [B, 2H]      batch_question
    g_theme_ref,    # [B, Theme]   gumbel noise, theme lookup
    g_dt_ref,       # [B, T]       gumbel noise, dt lookup
    g_dtqv_ref,     # [B, 2]       gumbel noise, dtqv lookup
    wih_t_ref,      # [4H, 4H]     drnn W_ih^T (PyTorch gate order i,f,g,o)
    whh_t_ref,      # [H, 4H]      drnn W_hh^T
    bgate_ref,      # [1, 4H]      drnn b_ih + b_hh
    theme_ref,      # [Theme, H]   theme embedding table
    theme_t_ref,    # [H, Theme]   its transpose
    fcv_wt_ref,     # [2H, H]      fc_v
    fcv_b_ref,      # [1, H]
    dtlk_wt_ref,    # [3H, 2H]     dt_look_fc
    dtlk_b_ref,     # [1, 2H]
    fc_wt_ref,      # [3H, 2H]     fc
    fc_b_ref,       # [1, 2H]
    fcf_wt_ref,     # [2H, 4H]     fc_final
    fcf_b_ref,      # [1, 4H]
    out_ref,        # [B, 4H]
):
    B, T, F4 = dia_ref.shape
    H = whh_t_ref.shape[0]

    # ---------------- drnn: single-layer LSTM, zero initial state ----------
    # Input projection for all timesteps with one MXU matmul (lane dim kept).
    x2d = dia_ref[...].reshape(B * T, F4)                                  # [B*T, 4H]
    xproj = jnp.dot(x2d, wih_t_ref[...],
                    preferred_element_type=_F32).reshape(B, T, F4)         # [B, T, 4H]
    whh_t = whh_t_ref[...]
    bgate = bgate_ref[...]
    h = jnp.zeros((B, H), _F32)
    c = jnp.zeros((B, H), _F32)
    hs = []
    for t in range(T):                   # static unroll: T = dialogue_window (small)
        gates = (xproj[:, t, :]
                 + jnp.dot(h, whh_t, preferred_element_type=_F32)
                 + bgate)                                                  # [B, 4H]
        i_g = jax.nn.sigmoid(gates[:, 0:H])
        f_g = jax.nn.sigmoid(gates[:, H:2 * H])
        g_g = jnp.tanh(gates[:, 2 * H:3 * H])
        o_g = jax.nn.sigmoid(gates[:, 3 * H:4 * H])
        c = f_g * c + i_g * g_g
        h = o_g * jnp.tanh(c)
        hs.append(h)
    drnn_hT = h                                                            # [B, H]

    # ---------------- theme lookup (batch-shared memory -> MXU matmuls) ----
    ctx = jnp.dot(drnn_hT, theme_t_ref[...], preferred_element_type=_F32)  # [B, Theme]
    scores = jnp.log(jnp.maximum(ctx, 1e-8)) + g_theme_ref[...]
    n_theme = scores.shape[-1]
    mx = jnp.max(scores, axis=-1, keepdims=True)
    it = lax.broadcasted_iota(jnp.int32, scores.shape, 1)
    first = jnp.min(jnp.where(scores >= mx, it, n_theme), axis=-1, keepdims=True)
    onehot = (it == first).astype(_F32)                                    # [B, Theme]
    theme_star = jnp.dot(onehot, theme_ref[...],
                         preferred_element_type=_F32)                      # [B, H]

    # ---------------- fc_v on video & question -----------------------------
    fcv_wt = fcv_wt_ref[...]
    fcv_b = fcv_b_ref[...]
    bv = jnp.dot(v_ref[...], fcv_wt, preferred_element_type=_F32) + fcv_b  # [B, H]
    bq = jnp.dot(q_ref[...], fcv_wt, preferred_element_type=_F32) + fcv_b  # [B, H]

    # ---------------- dt lookup ---------------------------------------------
    # dt memory slot t = [drnn_out_t ; theme_star]; query = dt_look_fc([bv;bq;theme])
    # torch cat -> split-weight matmuls (sublane-aligned weight slices).
    dtlk_wt = dtlk_wt_ref[...]
    q_dt = (jnp.dot(bv, dtlk_wt[0:H, :], preferred_element_type=_F32)
            + jnp.dot(bq, dtlk_wt[H:2 * H, :], preferred_element_type=_F32)
            + jnp.dot(theme_star, dtlk_wt[2 * H:3 * H, :],
                      preferred_element_type=_F32)
            + dtlk_b_ref[...])                                             # [B, 2H]
    # theme_star half is shared by every slot -> constant context term.
    q_lo = q_dt[:, 0:H]
    q_hi = q_dt[:, H:2 * H]
    const = jnp.sum(q_hi * theme_star, axis=-1, keepdims=True)             # [B, 1]
    best = None
    sel_h = None
    for t in range(T):                   # static unroll, running argmax (VPU selects)
        ctx_t = jnp.sum(q_lo * hs[t], axis=-1, keepdims=True) + const      # [B, 1]
        sc_t = jnp.log(jnp.maximum(ctx_t, 1e-8)) + g_dt_ref[:, t:t + 1]
        if t == 0:
            best, sel_h = sc_t, hs[t]
        else:
            take = sc_t > best           # strict ">" keeps first max (tie-break)
            best = jnp.where(take, sc_t, best)
            sel_h = jnp.where(take, hs[t], sel_h)
    selected_dt = jnp.concatenate([sel_h, theme_star], axis=-1)            # [B, 2H]

    # ---------------- dtqv lookup --------------------------------------------
    # dtqv memory slots = {[bv;bq], selected_dt}; query = fc([bv; selected_dt])
    fc_wt = fc_wt_ref[...]
    q_dtqv = (jnp.dot(bv, fc_wt[0:H, :], preferred_element_type=_F32)
              + jnp.dot(selected_dt, fc_wt[H:3 * H, :],
                        preferred_element_type=_F32)
              + fc_b_ref[...])                                             # [B, 2H]
    slot0 = jnp.concatenate([bv, bq], axis=-1)                             # [B, 2H]
    ctx0 = jnp.sum(q_dtqv * slot0, axis=-1, keepdims=True)
    ctx1 = jnp.sum(q_dtqv * selected_dt, axis=-1, keepdims=True)
    sc0 = jnp.log(jnp.maximum(ctx0, 1e-8)) + g_dtqv_ref[:, 0:1]
    sc1 = jnp.log(jnp.maximum(ctx1, 1e-8)) + g_dtqv_ref[:, 1:2]
    selected_dtqv = jnp.where(sc1 > sc0, selected_dt, slot0)               # [B, 2H]

    # ---------------- fc_final (lane-dense [B, 4H = 128] store) --------------
    out_ref[...] = (jnp.dot(selected_dtqv, fcf_wt_ref[...],
                            preferred_element_type=_F32) + fcf_b_ref[...])


# --------------------------- wrapper ----------------------------------------

def gcm_forward(params, batch_video, batch_question, dialogue_feature, rng):
    """batch_video / batch_question: [B, 1, 2H]; dialogue_feature: [B, T, 4H]."""
    B, T, _ = dialogue_feature.shape
    H = params["drnn_whh_t"].shape[0]
    theme_size = params["theme_embed"].shape[0]

    k1, k2, k3 = jax.random.split(rng, 3)
    g_theme = jax.random.gumbel(k1, (B, theme_size), _F32)
    g_dt = jax.random.gumbel(k2, (B, T), _F32)
    g_dtqv = jax.random.gumbel(k3, (B, 2), _F32)

    # drop the size-1 frames dim (free bitcast reshape); everything else is fused
    v_in = batch_video.reshape(B, -1).astype(_F32)                         # [B, 2H]
    q_in = batch_question.reshape(B, -1).astype(_F32)                      # [B, 2H]

    args = (
        dialogue_feature.astype(_F32), v_in, q_in, g_theme, g_dt, g_dtqv,
        params["drnn_wih_t"], params["drnn_whh_t"], params["drnn_b"],
        params["theme_embed"], params["theme_embed_t"],
        params["fc_v_wt"], params["fc_v_b"],
        params["dt_look_wt"], params["dt_look_b"],
        params["fc_wt"], params["fc_b"],
        params["fc_final_wt"], params["fc_final_b"],
    )
    return pl.pallas_call(
        _gcm_fused_kernel,
        out_shape=jax.ShapeDtypeStruct((B, 4 * H), _F32),
        in_specs=[VMEM_SPEC] * len(args),
        out_specs=VMEM_SPEC,
    )(*args)


# --------------------------- main --------------------------------------------

if __name__ == "__main__":
    # Shapes implied by GCM.forward:
    #   embeded_size == hidden_size (theme bmm contracts with drnn hidden),
    #   video_feature_size == 2*hidden_size (fc_v input),
    #   batch_video / batch_question : [bsz, 1, 2*hidden] (dim=2 concat with a
    #   size-1 dim-1 tensor forces max_frames == 1),
    #   dialogue_feature : [bsz, dialogue_window, 4*hidden] (drnn input size).
    hidden_size = 32
    H = hidden_size
    embeded_size = hidden_size
    video_feature_size = 2 * hidden_size
    theme_size = 6
    bsz = 2
    dialogue_window = 4

    key = jax.random.PRNGKey(0)
    keys = jax.random.split(key, 16)

    def init(k, shape, scale=0.1):
        return scale * jax.random.normal(k, shape, jnp.float32)

    # Weights stored pre-transposed ("x @ W^T" layout); LSTM biases pre-folded.
    params = {
        "theme_embed":  init(keys[0], (theme_size, embeded_size), 1.0),
        "drnn_wih_t":   init(keys[1], (4 * H, 4 * H)),   # W_ih^T, gate order (i,f,g,o)
        "drnn_whh_t":   init(keys[2], (H, 4 * H)),       # W_hh^T
        "drnn_b":       init(keys[3], (1, 4 * H)),       # b_ih + b_hh
        "fc_v_wt":      init(keys[4], (2 * H, H)),
        "fc_v_b":       init(keys[5], (1, H)),
        "dt_look_wt":   init(keys[6], (3 * H, 2 * H)),
        "dt_look_b":    init(keys[7], (1, 2 * H)),
        "fc_wt":        init(keys[8], (3 * H, 2 * H)),
        "fc_b":         init(keys[9], (1, 2 * H)),
        "fc_final_wt":  init(keys[10], (2 * H, 4 * H)),
        "fc_final_b":   init(keys[11], (1, 4 * H)),
    }
    params["theme_embed_t"] = jnp.asarray(params["theme_embed"].T)
    # TODO(synk): embed / question_rnn / video_rnn / video_rnn_fc and fc_cm are
    # never used by the value GCM.forward returns, so their parameters are not
    # materialized and the dead fc_cm outputs are not computed.

    batch_video = jax.random.normal(keys[12], (bsz, 1, video_feature_size), jnp.float32)
    batch_question = jax.random.normal(keys[13], (bsz, 1, 2 * hidden_size), jnp.float32)
    dialogue_feature = jax.random.normal(
        keys[14], (bsz, dialogue_window, 4 * hidden_size), jnp.float32)
    gumbel_key = keys[15]

    fwd = jax.jit(gcm_forward)
    out = fwd(params, batch_video, batch_question, dialogue_feature, gumbel_key)
    out = jax.block_until_ready(out)
    assert out.shape == (bsz, 4 * hidden_size), out.shape
    assert out.dtype == jnp.float32
    print("KERNEL_OK")
</pallas_src>

<mosaic_0001>
module attributes {stable_mosaic.version = 11 : i64} {
  func.func @_gcm_fused_kernel(%arg0: memref<2x4x128xf32, #tpu.memory_space<vmem>>, %arg1: memref<2x64xf32, #tpu.memory_space<vmem>>, %arg2: memref<2x64xf32, #tpu.memory_space<vmem>>, %arg3: memref<2x6xf32, #tpu.memory_space<vmem>>, %arg4: memref<2x4xf32, #tpu.memory_space<vmem>>, %arg5: memref<2x2xf32, #tpu.memory_space<vmem>>, %arg6: memref<128x128xf32, #tpu.memory_space<vmem>>, %arg7: memref<32x128xf32, #tpu.memory_space<vmem>>, %arg8: memref<1x128xf32, #tpu.memory_space<vmem>>, %arg9: memref<6x32xf32, #tpu.memory_space<vmem>>, %arg10: memref<32x6xf32, #tpu.memory_space<vmem>>, %arg11: memref<64x32xf32, #tpu.memory_space<vmem>>, %arg12: memref<1x32xf32, #tpu.memory_space<vmem>>, %arg13: memref<96x64xf32, #tpu.memory_space<vmem>>, %arg14: memref<1x64xf32, #tpu.memory_space<vmem>>, %arg15: memref<96x64xf32, #tpu.memory_space<vmem>>, %arg16: memref<1x64xf32, #tpu.memory_space<vmem>>, %arg17: memref<64x128xf32, #tpu.memory_space<vmem>>, %arg18: memref<1x128xf32, #tpu.memory_space<vmem>>, %arg19: memref<2x128xf32, #tpu.memory_space<vmem>>) attributes {dimension_semantics = [], scalar_prefetch = 0 : i64, scratch_operands = 0 : i64, tpu.core_type = #tpu.core_type<tc>} {
    %c0 = arith.constant 0 : index
    %c0_0 = arith.constant 0 : index
    %c0_1 = arith.constant 0 : index
    %0 = vector.load %arg0[%c0, %c0_0, %c0_1] : memref<2x4x128xf32, #tpu.memory_space<vmem>>, vector<2x4x128xf32>
    %1 = vector.shape_cast %0 : vector<2x4x128xf32> to vector<8x128xf32>
    %c0_2 = arith.constant 0 : index
    %c0_3 = arith.constant 0 : index
    %2 = vector.load %arg6[%c0_2, %c0_3] : memref<128x128xf32, #tpu.memory_space<vmem>>, vector<128x128xf32>
    %cst = arith.constant dense<0.000000e+00> : vector<8x128xf32>
    %3 = tpu.matmul %1, %2, %cst {dimension_numbers = #tpu.dot_dimension_numbers<[1], [0], [0], [1], [0, 0, 1, 1], [], []>} : vector<8x128xf32>, vector<128x128xf32>, vector<8x128xf32> -> vector<8x128xf32>
    %4 = vector.shape_cast %3 : vector<8x128xf32> to vector<2x4x128xf32>
    %c0_4 = arith.constant 0 : index
    %c0_5 = arith.constant 0 : index
    %5 = vector.load %arg7[%c0_4, %c0_5] : memref<32x128xf32, #tpu.memory_space<vmem>>, vector<32x128xf32>
    %c0_6 = arith.constant 0 : index
    %c0_7 = arith.constant 0 : index
    %6 = vector.load %arg8[%c0_6, %c0_7] : memref<1x128xf32, #tpu.memory_space<vmem>>, vector<1x128xf32>
    %cst_8 = arith.constant 0.000000e+00 : f32
    %7 = vector.broadcast %cst_8 : f32 to vector<2x32xf32>
    %cst_9 = arith.constant 0.000000e+00 : f32
    %8 = vector.broadcast %cst_9 : f32 to vector<2x32xf32>
    %9 = vector.extract_strided_slice %4 {offsets = [0, 0, 0], sizes = [2, 1, 128], strides = [1, 1, 1]} : vector<2x4x128xf32> to vector<2x1x128xf32>
    %10 = vector.shape_cast %9 : vector<2x1x128xf32> to vector<2x128xf32>
    %cst_10 = arith.constant dense<0.000000e+00> : vector<2x128xf32>
    %11 = tpu.matmul %7, %5, %cst_10 {dimension_numbers = #tpu.dot_dimension_numbers<[1], [0], [0], [1], [0, 0, 1, 1], [], []>} : vector<2x32xf32>, vector<32x128xf32>, vector<2x128xf32> -> vector<2x128xf32>
    %12 = arith.addf %10, %11 : vector<2x128xf32>
    %13 = vector.broadcast %6 : vector<1x128xf32> to vector<2x128xf32>
    %14 = arith.addf %12, %13 : vector<2x128xf32>
    %15 = vector.extract_strided_slice %14 {offsets = [0, 0], sizes = [2, 32], strides = [1, 1]} : vector<2x128xf32> to vector<2x32xf32>
    %16 = arith.negf %15 : vector<2x32xf32>
    %17 = math.exp %16 : vector<2x32xf32>
    %cst_11 = arith.constant 1.000000e+00 : f32
    %18 = vector.broadcast %cst_11 : f32 to vector<2x32xf32>
    %19 = arith.addf %18, %17 : vector<2x32xf32>
    %20 = arith.divf %18, %19 : vector<2x32xf32>
    %21 = vector.extract_strided_slice %14 {offsets = [0, 32], sizes = [2, 32], strides = [1, 1]} : vector<2x128xf32> to vector<2x32xf32>
    %22 = arith.negf %21 : vector<2x32xf32>
    %23 = math.exp %22 : vector<2x32xf32>
    %cst_12 = arith.constant 1.000000e+00 : f32
    %24 = vector.broadcast %cst_12 : f32 to vector<2x32xf32>
    %25 = arith.addf %24, %23 : vector<2x32xf32>
    %26 = arith.divf %24, %25 : vector<2x32xf32>
    %27 = vector.extract_strided_slice %14 {offsets = [0, 64], sizes = [2, 32], strides = [1, 1]} : vector<2x128xf32> to vector<2x32xf32>
    %28 = math.tanh %27 : vector<2x32xf32>
    %29 = vector.extract_strided_slice %14 {offsets = [0, 96], sizes = [2, 32], strides = [1, 1]} : vector<2x128xf32> to vector<2x32xf32>
    %30 = arith.negf %29 : vector<2x32xf32>
    %31 = math.exp %30 : vector<2x32xf32>
    %cst_13 = arith.constant 1.000000e+00 : f32
    %32 = vector.broadcast %cst_13 : f32 to vector<2x32xf32>
    %33 = arith.addf %32, %31 : vector<2x32xf32>
    %34 = arith.divf %32, %33 : vector<2x32xf32>
    %35 = arith.mulf %26, %8 : vector<2x32xf32>
    %36 = arith.mulf %20, %28 : vector<2x32xf32>
    %37 = arith.addf %35, %36 : vector<2x32xf32>
    %38 = math.tanh %37 : vector<2x32xf32>
    %39 = arith.mulf %34, %38 : vector<2x32xf32>
    %40 = vector.extract_strided_slice %4 {offsets = [0, 1, 0], sizes = [2, 1, 128], strides = [1, 1, 1]} : vector<2x4x128xf32> to vector<2x1x128xf32>
    %41 = vector.shape_cast %40 : vector<2x1x128xf32> to vector<2x128xf32>
    %cst_14 = arith.constant dense<0.000000e+00> : vector<2x128xf32>
    %42 = tpu.matmul %39, %5, %cst_14 {dimension_numbers = #tpu.dot_dimension_numbers<[1], [0], [0], [1], [0, 0, 1, 1], [], []>} : vector<2x32xf32>, vector<32x128xf32>, vector<2x128xf32> -> vector<2x128xf32>
    %43 = arith.addf %41, %42 : vector<2x128xf32>
    %44 = vector.broadcast %6 : vector<1x128xf32> to vector<2x128xf32>
    %45 = arith.addf %43, %44 : vector<2x128xf32>
    %46 = vector.extract_strided_slice %45 {offsets = [0, 0], sizes = [2, 32], strides = [1, 1]} : vector<2x128xf32> to vector<2x32xf32>
    %47 = arith.negf %46 : vector<2x32xf32>
    %48 = math.exp %47 : vector<2x32xf32>
    %cst_15 = arith.constant 1.000000e+00 : f32
    %49 = vector.broadcast %cst_15 : f32 to vector<2x32xf32>
    %50 = arith.addf %49, %48 : vector<2x32xf32>
    %51 = arith.divf %49, %50 : vector<2x32xf32>
    %52 = vector.extract_strided_slice %45 {offsets = [0, 32], sizes = [2, 32], strides = [1, 1]} : vector<2x128xf32> to vector<2x32xf32>
    %53 = arith.negf %52 : vector<2x32xf32>
    %54 = math.exp %53 : vector<2x32xf32>
    %cst_16 = arith.constant 1.000000e+00 : f32
    %55 = vector.broadcast %cst_16 : f32 to vector<2x32xf32>
    %56 = arith.addf %55, %54 : vector<2x32xf32>
    %57 = arith.divf %55, %56 : vector<2x32xf32>
    %58 = vector.extract_strided_slice %45 {offsets = [0, 64], sizes = [2, 32], strides = [1, 1]} : vector<2x128xf32> to vector<2x32xf32>
    %59 = math.tanh %58 : vector<2x32xf32>
    %60 = vector.extract_strided_slice %45 {offsets = [0, 96], sizes = [2, 32], strides = [1, 1]} : vector<2x128xf32> to vector<2x32xf32>
    %61 = arith.negf %60 : vector<2x32xf32>
    %62 = math.exp %61 : vector<2x32xf32>
    %cst_17 = arith.constant 1.000000e+00 : f32
    %63 = vector.broadcast %cst_17 : f32 to vector<2x32xf32>
    %64 = arith.addf %63, %62 : vector<2x32xf32>
    %65 = arith.divf %63, %64 : vector<2x32xf32>
    %66 = arith.mulf %57, %37 : vector<2x32xf32>
    %67 = arith.mulf %51, %59 : vector<2x32xf32>
    %68 = arith.addf %66, %67 : vector<2x32xf32>
    %69 = math.tanh %68 : vector<2x32xf32>
    %70 = arith.mulf %65, %69 : vector<2x32xf32>
    %71 = vector.extract_strided_slice %4 {offsets = [0, 2, 0], sizes = [2, 1, 128], strides = [1, 1, 1]} : vector<2x4x128xf32> to vector<2x1x128xf32>
    %72 = vector.shape_cast %71 : vector<2x1x128xf32> to vector<2x128xf32>
    %cst_18 = arith.constant dense<0.000000e+00> : vector<2x128xf32>
    %73 = tpu.matmul %70, %5, %cst_18 {dimension_numbers = #tpu.dot_dimension_numbers<[1], [0], [0], [1], [0, 0, 1, 1], [], []>} : vector<2x32xf32>, vector<32x128xf32>, vector<2x128xf32> -> vector<2x128xf32>
    %74 = arith.addf %72, %73 : vector<2x128xf32>
    %75 = vector.broadcast %6 : vector<1x128xf32> to vector<2x128xf32>
    %76 = arith.addf %74, %75 : vector<2x128xf32>
    %77 = vector.extract_strided_slice %76 {offsets = [0, 0], sizes = [2, 32], strides = [1, 1]} : vector<2x128xf32> to vector<2x32xf32>
    %78 = arith.negf %77 : vector<2x32xf32>
    %79 = math.exp %78 : vector<2x32xf32>
    %cst_19 = arith.constant 1.000000e+00 : f32
    %80 = vector.broadcast %cst_19 : f32 to vector<2x32xf32>
    %81 = arith.addf %80, %79 : vector<2x32xf32>
    %82 = arith.divf %80, %81 : vector<2x32xf32>
    %83 = vector.extract_strided_slice %76 {offsets = [0, 32], sizes = [2, 32], strides = [1, 1]} : vector<2x128xf32> to vector<2x32xf32>
    %84 = arith.negf %83 : vector<2x32xf32>
    %85 = math.exp %84 : vector<2x32xf32>
    %cst_20 = arith.constant 1.000000e+00 : f32
    %86 = vector.broadcast %cst_20 : f32 to vector<2x32xf32>
    %87 = arith.addf %86, %85 : vector<2x32xf32>
    %88 = arith.divf %86, %87 : vector<2x32xf32>
    %89 = vector.extract_strided_slice %76 {offsets = [0, 64], sizes = [2, 32], strides = [1, 1]} : vector<2x128xf32> to vector<2x32xf32>
    %90 = math.tanh %89 : vector<2x32xf32>
    %91 = vector.extract_strided_slice %76 {offsets = [0, 96], sizes = [2, 32], strides = [1, 1]} : vector<2x128xf32> to vector<2x32xf32>
    %92 = arith.negf %91 : vector<2x32xf32>
    %93 = math.exp %92 : vector<2x32xf32>
    %cst_21 = arith.constant 1.000000e+00 : f32
    %94 = vector.broadcast %cst_21 : f32 to vector<2x32xf32>
    %95 = arith.addf %94, %93 : vector<2x32xf32>
    %96 = arith.divf %94, %95 : vector<2x32xf32>
    %97 = arith.mulf %88, %68 : vector<2x32xf32>
    %98 = arith.mulf %82, %90 : vector<2x32xf32>
    %99 = arith.addf %97, %98 : vector<2x32xf32>
    %100 = math.tanh %99 : vector<2x32xf32>
    %101 = arith.mulf %96, %100 : vector<2x32xf32>
    %102 = vector.extract_strided_slice %4 {offsets = [0, 3, 0], sizes = [2, 1, 128], strides = [1, 1, 1]} : vector<2x4x128xf32> to vector<2x1x128xf32>
    %103 = vector.shape_cast %102 : vector<2x1x128xf32> to vector<2x128xf32>
    %cst_22 = arith.constant dense<0.000000e+00> : vector<2x128xf32>
    %104 = tpu.matmul %101, %5, %cst_22 {dimension_numbers = #tpu.dot_dimension_numbers<[1], [0], [0], [1], [0, 0, 1, 1], [], []>} : vector<2x32xf32>, vector<32x128xf32>, vector<2x128xf32> -> vector<2x128xf32>
    %105 = arith.addf %103, %104 : vector<2x128xf32>
    %106 = vector.broadcast %6 : vector<1x128xf32> to vector<2x128xf32>
    %107 = arith.addf %105, %106 : vector<2x128xf32>
    %108 = vector.extract_strided_slice %107 {offsets = [0, 0], sizes = [2, 32], strides = [1, 1]} : vector<2x128xf32> to vector<2x32xf32>
    %109 = arith.negf %108 : vector<2x32xf32>
    %110 = math.exp %109 : vector<2x32xf32>
    %cst_23 = arith.constant 1.000000e+00 : f32
    %111 = vector.broadcast %cst_23 : f32 to vector<2x32xf32>
    %112 = arith.addf %111, %110 : vector<2x32xf32>
    %113 = arith.divf %111, %112 : vector<2x32xf32>
    %114 = vector.extract_strided_slice %107 {offsets = [0, 32], sizes = [2, 32], strides = [1, 1]} : vector<2x128xf32> to vector<2x32xf32>
    %115 = arith.negf %114 : vector<2x32xf32>
    %116 = math.exp %115 : vector<2x32xf32>
    %cst_24 = arith.constant 1.000000e+00 : f32
    %117 = vector.broadcast %cst_24 : f32 to vector<2x32xf32>
    %118 = arith.addf %117, %116 : vector<2x32xf32>
    %119 = arith.divf %117, %118 : vector<2x32xf32>
    %120 = vector.extract_strided_slice %107 {offsets = [0, 64], sizes = [2, 32], strides = [1, 1]} : vector<2x128xf32> to vector<2x32xf32>
    %121 = math.tanh %120 : vector<2x32xf32>
    %122 = vector.extract_strided_slice %107 {offsets = [0, 96], sizes = [2, 32], strides = [1, 1]} : vector<2x128xf32> to vector<2x32xf32>
    %123 = arith.negf %122 : vector<2x32xf32>
    %124 = math.exp %123 : vector<2x32xf32>
    %cst_25 = arith.constant 1.000000e+00 : f32
    %125 = vector.broadcast %cst_25 : f32 to vector<2x32xf32>
    %126 = arith.addf %125, %124 : vector<2x32xf32>
    %127 = arith.divf %125, %126 : vector<2x32xf32>
    %128 = arith.mulf %119, %99 : vector<2x32xf32>
    %129 = arith.mulf %113, %121 : vector<2x32xf32>
    %130 = arith.addf %128, %129 : vector<2x32xf32>
    %131 = math.tanh %130 : vector<2x32xf32>
    %132 = arith.mulf %127, %131 : vector<2x32xf32>
    %c0_26 = arith.constant 0 : index
    %c0_27 = arith.constant 0 : index
    %133 = vector.load %arg10[%c0_26, %c0_27] : memref<32x6xf32, #tpu.memory_space<vmem>>, vector<32x6xf32>
    %cst_28 = arith.constant dense<0.000000e+00> : vector<2x6xf32>
    %134 = tpu.matmul %132, %133, %cst_28 {dimension_numbers = #tpu.dot_dimension_numbers<[1], [0], [0], [1], [0, 0, 1, 1], [], []>} : vector<2x32xf32>, vector<32x6xf32>, vector<2x6xf32> -> vector<2x6xf32>
    %cst_29 = arith.constant 9.99999993E-9 : f32
    %135 = vector.broadcast %cst_29 : f32 to vector<2x6xf32>
    %136 = arith.maximumf %134, %135 : vector<2x6xf32>
    %137 = math.log %136 : vector<2x6xf32>
    %c0_30 = arith.constant 0 : index
    %c0_31 = arith.constant 0 : index
    %138 = vector.load %arg3[%c0_30, %c0_31] : memref<2x6xf32, #tpu.memory_space<vmem>>, vector<2x6xf32>
    %139 = arith.addf %137, %138 : vector<2x6xf32>
    %cst_32 = arith.constant dense<0xFF800000> : vector<2xf32>
    %140 = vector.multi_reduction <maximumf>, %139, %cst_32 [1] : vector<2x6xf32> to vector<2xf32>
    %141 = vector.shape_cast %140 : vector<2xf32> to vector<2x1xf32>
    %142 = tpu.iota {dimensions = array<i32: 1>} : vector<2x6xi32>
    %143 = vector.broadcast %141 : vector<2x1xf32> to vector<2x6xf32>
    %144 = arith.cmpf oge, %139, %143 : vector<2x6xf32>
    %c6_i32 = arith.constant 6 : i32
    %145 = vector.broadcast %c6_i32 : i32 to vector<2x6xi32>
    %146 = arith.select %144, %142, %145 : vector<2x6xi1>, vector<2x6xi32>
    %cst_33 = arith.constant dense<2147483647> : vector<2xi32>
    %147 = vector.multi_reduction <minsi>, %146, %cst_33 [1] : vector<2x6xi32> to vector<2xi32>
    %148 = vector.shape_cast %147 : vector<2xi32> to vector<2x1xi32>
    %149 = vector.broadcast %148 : vector<2x1xi32> to vector<2x6xi32>
    %150 = arith.cmpi eq, %142, %149 : vector<2x6xi32>
    %151 = arith.extui %150 : vector<2x6xi1> to vector<2x6xi32>
    %152 = arith.sitofp %151 : vector<2x6xi32> to vector<2x6xf32>
    %c0_34 = arith.constant 0 : index
    %c0_35 = arith.constant 0 : index
    %153 = vector.load %arg9[%c0_34, %c0_35] : memref<6x32xf32, #tpu.memory_space<vmem>>, vector<6x32xf32>
    %cst_36 = arith.constant dense<0.000000e+00> : vector<2x32xf32>
    %154 = tpu.matmul %152, %153, %cst_36 {dimension_numbers = #tpu.dot_dimension_numbers<[1], [0], [0], [1], [0, 0, 1, 1], [], []>} : vector<2x6xf32>, vector<6x32xf32>, vector<2x32xf32> -> vector<2x32xf32>
    %c0_37 = arith.constant 0 : index
    %c0_38 = arith.constant 0 : index
    %155 = vector.load %arg11[%c0_37, %c0_38] : memref<64x32xf32, #tpu.memory_space<vmem>>, vector<64x32xf32>
    %c0_39 = arith.constant 0 : index
    %c0_40 = arith.constant 0 : index
    %156 = vector.load %arg12[%c0_39, %c0_40] : memref<1x32xf32, #tpu.memory_space<vmem>>, vector<1x32xf32>
    %c0_41 = arith.constant 0 : index
    %c0_42 = arith.constant 0 : index
    %157 = vector.load %arg1[%c0_41, %c0_42] : memref<2x64xf32, #tpu.memory_space<vmem>>, vector<2x64xf32>
    %cst_43 = arith.constant dense<0.000000e+00> : vector<2x32xf32>
    %158 = tpu.matmul %157, %155, %cst_43 {dimension_numbers = #tpu.dot_dimension_numbers<[1], [0], [0], [1], [0, 0, 1, 1], [], []>} : vector<2x64xf32>, vector<64x32xf32>, vector<2x32xf32> -> vector<2x32xf32>
    %159 = vector.broadcast %156 : vector<1x32xf32> to vector<2x32xf32>
    %160 = arith.addf %158, %159 : vector<2x32xf32>
    %c0_44 = arith.constant 0 : index
    %c0_45 = arith.constant 0 : index
    %161 = vector.load %arg2[%c0_44, %c0_45] : memref<2x64xf32, #tpu.memory_space<vmem>>, vector<2x64xf32>
    %cst_46 = arith.constant dense<0.000000e+00> : vector<2x32xf32>
    %162 = tpu.matmul %161, %155, %cst_46 {dimension_numbers = #tpu.dot_dimension_numbers<[1], [0], [0], [1], [0, 0, 1, 1], [], []>} : vector<2x64xf32>, vector<64x32xf32>, vector<2x32xf32> -> vector<2x32xf32>
    %163 = vector.broadcast %156 : vector<1x32xf32> to vector<2x32xf32>
    %164 = arith.addf %162, %163 : vector<2x32xf32>
    %c0_47 = arith.constant 0 : index
    %c0_48 = arith.constant 0 : index
    %165 = vector.load %arg13[%c0_47, %c0_48] : memref<96x64xf32, #tpu.memory_space<vmem>>, vector<96x64xf32>
    %166 = vector.extract_strided_slice %165 {offsets = [0, 0], sizes = [32, 64], strides = [1, 1]} : vector<96x64xf32> to vector<32x64xf32>
    %cst_49 = arith.constant dense<0.000000e+00> : vector<2x64xf32>
    %167 = tpu.matmul %160, %166, %cst_49 {dimension_numbers = #tpu.dot_dimension_numbers<[1], [0], [0], [1], [0, 0, 1, 1], [], []>} : vector<2x32xf32>, vector<32x64xf32>, vector<2x64xf32> -> vector<2x64xf32>
    %168 = vector.extract_strided_slice %165 {offsets = [32, 0], sizes = [32, 64], strides = [1, 1]} : vector<96x64xf32> to vector<32x64xf32>
    %cst_50 = arith.constant dense<0.000000e+00> : vector<2x64xf32>
    %169 = tpu.matmul %164, %168, %cst_50 {dimension_numbers = #tpu.dot_dimension_numbers<[1], [0], [0], [1], [0, 0, 1, 1], [], []>} : vector<2x32xf32>, vector<32x64xf32>, vector<2x64xf32> -> vector<2x64xf32>
    %170 = arith.addf %167, %169 : vector<2x64xf32>
    %171 = vector.extract_strided_slice %165 {offsets = [64, 0], sizes = [32, 64], strides = [1, 1]} : vector<96x64xf32> to vector<32x64xf32>
    %cst_51 = arith.constant dense<0.000000e+00> : vector<2x64xf32>
    %172 = tpu.matmul %154, %171, %cst_51 {dimension_numbers = #tpu.dot_dimension_numbers<[1], [0], [0], [1], [0, 0, 1, 1], [], []>} : vector<2x32xf32>, vector<32x64xf32>, vector<2x64xf32> -> vector<2x64xf32>
    %173 = arith.addf %170, %172 : vector<2x64xf32>
    %c0_52 = arith.constant 0 : index
    %c0_53 = arith.constant 0 : index
    %174 = vector.load %arg14[%c0_52, %c0_53] : memref<1x64xf32, #tpu.memory_space<vmem>>, vector<1x64xf32>
    %175 = vector.broadcast %174 : vector<1x64xf32> to vector<2x64xf32>
    %176 = arith.addf %173, %175 : vector<2x64xf32>
    %177 = vector.extract_strided_slice %176 {offsets = [0, 0], sizes = [2, 32], strides = [1, 1]} : vector<2x64xf32> to vector<2x32xf32>
    %178 = vector.extract_strided_slice %176 {offsets = [0, 32], sizes = [2, 32], strides = [1, 1]} : vector<2x64xf32> to vector<2x32xf32>
    %179 = arith.mulf %178, %154 : vector<2x32xf32>
    %cst_54 = arith.constant dense<0.000000e+00> : vector<2xf32>
    %180 = vector.multi_reduction <add>, %179, %cst_54 [1] : vector<2x32xf32> to vector<2xf32>
    %181 = vector.shape_cast %180 : vector<2xf32> to vector<2x1xf32>
    %182 = arith.mulf %177, %39 : vector<2x32xf32>
    %cst_55 = arith.constant dense<0.000000e+00> : vector<2xf32>
    %183 = vector.multi_reduction <add>, %182, %cst_55 [1] : vector<2x32xf32> to vector<2xf32>
    %184 = vector.shape_cast %183 : vector<2xf32> to vector<2x1xf32>
    %185 = arith.addf %184, %181 : vector<2x1xf32>
    %cst_56 = arith.constant 9.99999993E-9 : f32
    %186 = vector.broadcast %cst_56 : f32 to vector<2x1xf32>
    %187 = arith.maximumf %185, %186 : vector<2x1xf32>
    %188 = math.log %187 : vector<2x1xf32>
    %c0_57 = arith.constant 0 : index
    %c0_58 = arith.constant 0 : index
    %189 = vector.load %arg4[%c0_57, %c0_58] : memref<2x4xf32, #tpu.memory_space<vmem>>, vector<2x1xf32>
    %190 = arith.addf %188, %189 : vector<2x1xf32>
    %191 = arith.mulf %177, %70 : vector<2x32xf32>
    %cst_59 = arith.constant dense<0.000000e+00> : vector<2xf32>
    %192 = vector.multi_reduction <add>, %191, %cst_59 [1] : vector<2x32xf32> to vector<2xf32>
    %193 = vector.shape_cast %192 : vector<2xf32> to vector<2x1xf32>
    %194 = arith.addf %193, %181 : vector<2x1xf32>
    %cst_60 = arith.constant 9.99999993E-9 : f32
    %195 = vector.broadcast %cst_60 : f32 to vector<2x1xf32>
    %196 = arith.maximumf %194, %195 : vector<2x1xf32>
    %197 = math.log %196 : vector<2x1xf32>
    %c0_61 = arith.constant 0 : index
    %c1 = arith.constant 1 : index
    %198 = vector.load %arg4[%c0_61, %c1] : memref<2x4xf32, #tpu.memory_space<vmem>>, vector<2x1xf32>
    %199 = arith.addf %197, %198 : vector<2x1xf32>
    %200 = arith.cmpf ogt, %199, %190 : vector<2x1xf32>
    %201 = arith.select %200, %199, %190 : vector<2x1xi1>, vector<2x1xf32>
    %202 = vector.shape_cast %200 : vector<2x1xi1> to vector<2x1xi1>
    %203 = vector.broadcast %202 : vector<2x1xi1> to vector<2x32xi1>
    %204 = arith.select %203, %70, %39 : vector<2x32xi1>, vector<2x32xf32>
    %205 = arith.mulf %177, %101 : vector<2x32xf32>
    %cst_62 = arith.constant dense<0.000000e+00> : vector<2xf32>
    %206 = vector.multi_reduction <add>, %205, %cst_62 [1] : vector<2x32xf32> to vector<2xf32>
    %207 = vector.shape_cast %206 : vector<2xf32> to vector<2x1xf32>
    %208 = arith.addf %207, %181 : vector<2x1xf32>
    %cst_63 = arith.constant 9.99999993E-9 : f32
    %209 = vector.broadcast %cst_63 : f32 to vector<2x1xf32>
    %210 = arith.maximumf %208, %209 : vector<2x1xf32>
    %211 = math.log %210 : vector<2x1xf32>
    %c0_64 = arith.constant 0 : index
    %c2 = arith.constant 2 : index
    %212 = vector.load %arg4[%c0_64, %c2] : memref<2x4xf32, #tpu.memory_space<vmem>>, vector<2x1xf32>
    %213 = arith.addf %211, %212 : vector<2x1xf32>
    %214 = arith.cmpf ogt, %213, %201 : vector<2x1xf32>
    %215 = arith.select %214, %213, %201 : vector<2x1xi1>, vector<2x1xf32>
    %216 = vector.shape_cast %214 : vector<2x1xi1> to vector<2x1xi1>
    %217 = vector.broadcast %216 : vector<2x1xi1> to vector<2x32xi1>
    %218 = arith.select %217, %101, %204 : vector<2x32xi1>, vector<2x32xf32>
    %219 = arith.mulf %177, %132 : vector<2x32xf32>
    %cst_65 = arith.constant dense<0.000000e+00> : vector<2xf32>
    %220 = vector.multi_reduction <add>, %219, %cst_65 [1] : vector<2x32xf32> to vector<2xf32>
    %221 = vector.shape_cast %220 : vector<2xf32> to vector<2x1xf32>
    %222 = arith.addf %221, %181 : vector<2x1xf32>
    %cst_66 = arith.constant 9.99999993E-9 : f32
    %223 = vector.broadcast %cst_66 : f32 to vector<2x1xf32>
    %224 = arith.maximumf %222, %223 : vector<2x1xf32>
    %225 = math.log %224 : vector<2x1xf32>
    %c0_67 = arith.constant 0 : index
    %c3 = arith.constant 3 : index
    %226 = vector.load %arg4[%c0_67, %c3] : memref<2x4xf32, #tpu.memory_space<vmem>>, vector<2x1xf32>
    %227 = arith.addf %225, %226 : vector<2x1xf32>
    %228 = arith.cmpf ogt, %227, %215 : vector<2x1xf32>
    %229 = vector.shape_cast %228 : vector<2x1xi1> to vector<2x1xi1>
    %230 = vector.broadcast %229 : vector<2x1xi1> to vector<2x32xi1>
    %231 = arith.select %230, %132, %218 : vector<2x32xi1>, vector<2x32xf32>
    %232 = tpu.concatenate %231, %154 in 1 : vector<2x32xf32>, vector<2x32xf32> -> vector<2x64xf32>
    %c0_68 = arith.constant 0 : index
    %c0_69 = arith.constant 0 : index
    %233 = vector.load %arg15[%c0_68, %c0_69] : memref<96x64xf32, #tpu.memory_space<vmem>>, vector<96x64xf32>
    %234 = vector.extract_strided_slice %233 {offsets = [0, 0], sizes = [32, 64], strides = [1, 1]} : vector<96x64xf32> to vector<32x64xf32>
    %cst_70 = arith.constant dense<0.000000e+00> : vector<2x64xf32>
    %235 = tpu.matmul %160, %234, %cst_70 {dimension_numbers = #tpu.dot_dimension_numbers<[1], [0], [0], [1], [0, 0, 1, 1], [], []>} : vector<2x32xf32>, vector<32x64xf32>, vector<2x64xf32> -> vector<2x64xf32>
    %236 = vector.extract_strided_slice %233 {offsets = [32, 0], sizes = [64, 64], strides = [1, 1]} : vector<96x64xf32> to vector<64x64xf32>
    %cst_71 = arith.constant dense<0.000000e+00> : vector<2x64xf32>
    %237 = tpu.matmul %232, %236, %cst_71 {dimension_numbers = #tpu.dot_dimension_numbers<[1], [0], [0], [1], [0, 0, 1, 1], [], []>} : vector<2x64xf32>, vector<64x64xf32>, vector<2x64xf32> -> vector<2x64xf32>
    %238 = arith.addf %235, %237 : vector<2x64xf32>
    %c0_72 = arith.constant 0 : index
    %c0_73 = arith.constant 0 : index
    %239 = vector.load %arg16[%c0_72, %c0_73] : memref<1x64xf32, #tpu.memory_space<vmem>>, vector<1x64xf32>
    %240 = vector.broadcast %239 : vector<1x64xf32> to vector<2x64xf32>
    %241 = arith.addf %238, %240 : vector<2x64xf32>
    %242 = tpu.concatenate %160, %164 in 1 : vector<2x32xf32>, vector<2x32xf32> -> vector<2x64xf32>
    %243 = arith.mulf %241, %242 : vector<2x64xf32>
    %cst_74 = arith.constant dense<0.000000e+00> : vector<2xf32>
    %244 = vector.multi_reduction <add>, %243, %cst_74 [1] : vector<2x64xf32> to vector<2xf32>
    %245 = vector.shape_cast %244 : vector<2xf32> to vector<2x1xf32>
    %246 = arith.mulf %241, %232 : vector<2x64xf32>
    %cst_75 = arith.constant dense<0.000000e+00> : vector<2xf32>
    %247 = vector.multi_reduction <add>, %246, %cst_75 [1] : vector<2x64xf32> to vector<2xf32>
    %248 = vector.shape_cast %247 : vector<2xf32> to vector<2x1xf32>
    %cst_76 = arith.constant 9.99999993E-9 : f32
    %249 = vector.broadcast %cst_76 : f32 to vector<2x1xf32>
    %250 = arith.maximumf %245, %249 : vector<2x1xf32>
    %251 = math.log %250 : vector<2x1xf32>
    %c0_77 = arith.constant 0 : index
    %c0_78 = arith.constant 0 : index
    %252 = vector.load %arg5[%c0_77, %c0_78] : memref<2x2xf32, #tpu.memory_space<vmem>>, vector<2x1xf32>
    %253 = arith.addf %251, %252 : vector<2x1xf32>
    %cst_79 = arith.constant 9.99999993E-9 : f32
    %254 = vector.broadcast %cst_79 : f32 to vector<2x1xf32>
    %255 = arith.maximumf %248, %254 : vector<2x1xf32>
    %256 = math.log %255 : vector<2x1xf32>
    %c0_80 = arith.constant 0 : index
    %c1_81 = arith.constant 1 : index
    %257 = vector.load %arg5[%c0_80, %c1_81] : memref<2x2xf32, #tpu.memory_space<vmem>>, vector<2x1xf32>
    %258 = arith.addf %256, %257 : vector<2x1xf32>
    %259 = arith.cmpf ogt, %258, %253 : vector<2x1xf32>
    %260 = vector.shape_cast %259 : vector<2x1xi1> to vector<2x1xi1>
    %261 = vector.broadcast %260 : vector<2x1xi1> to vector<2x64xi1>
    %262 = arith.select %261, %232, %242 : vector<2x64xi1>, vector<2x64xf32>
    %c0_82 = arith.constant 0 : index
    %c0_83 = arith.constant 0 : index
    %263 = vector.load %arg17[%c0_82, %c0_83] : memref<64x128xf32, #tpu.memory_space<vmem>>, vector<64x128xf32>
    %cst_84 = arith.constant dense<0.000000e+00> : vector<2x128xf32>
    %264 = tpu.matmul %262, %263, %cst_84 {dimension_numbers = #tpu.dot_dimension_numbers<[1], [0], [0], [1], [0, 0, 1, 1], [], []>} : vector<2x64xf32>, vector<64x128xf32>, vector<2x128xf32> -> vector<2x128xf32>
    %c0_85 = arith.constant 0 : index
    %c0_86 = arith.constant 0 : index
    %265 = vector.load %arg18[%c0_85, %c0_86] : memref<1x128xf32, #tpu.memory_space<vmem>>, vector<1x128xf32>
    %266 = vector.broadcast %265 : vector<1x128xf32> to vector<2x128xf32>
    %267 = arith.addf %264, %266 : vector<2x128xf32>
    %c0_87 = arith.constant 0 : index
    %c0_88 = arith.constant 0 : index
    %268 = vector.load %arg19[%c0_87, %c0_88] : memref<2x128xf32, #tpu.memory_space<vmem>>, vector<2x128xf32>
    tpu.vector_store %arg19[%c0_87, %c0_88], %267 {strides = array<i32>} : memref<2x128xf32, #tpu.memory_space<vmem>>, vector<2x128xf32>,
    return
  }
}

</mosaic_0001>

<llo_original>
// kernel: gcm_forward.3
$region0: #{gcm_forward.3}
  #allocation0 [shape = 'u32[]', space=smem, size = 0x4, offset = 0x4, fixed_abs, tag = 'smem constant byte address 0x4 - core index']
  #allocation1 [shape = 'u32[144,128]{1,0:T(1,128)}', space=vmem, size = 0x12000, scoped, tag = 'internal scratch']
  %s0 = inlined_call_operand.vmem [shape: f32[2,4,128], index: 0, kind: input, shape index: {}]
  %s1 = inlined_call_operand.vmem [shape: f32[2,64], index: 1, kind: input, shape index: {}]
  %s2 = inlined_call_operand.vmem [shape: f32[2,64], index: 2, kind: input, shape index: {}]
  %s3 = inlined_call_operand.vmem [shape: f32[2,6], index: 3, kind: input, shape index: {}]
  %s4 = inlined_call_operand.vmem [shape: f32[2,4], index: 4, kind: input, shape index: {}]
  %s5 = inlined_call_operand.vmem [shape: f32[2,2], index: 5, kind: input, shape index: {}]
  %s6 = inlined_call_operand.vmem [shape: f32[128,128], index: 6, kind: input, shape index: {}]
  %s7 = inlined_call_operand.vmem [shape: f32[32,128], index: 7, kind: input, shape index: {}]
  %s8 = inlined_call_operand.vmem [shape: f32[1,128], index: 8, kind: input, shape index: {}]
  %s9 = inlined_call_operand.vmem [shape: f32[6,32], index: 9, kind: input, shape index: {}]
  %s10 = inlined_call_operand.vmem [shape: f32[32,6], index: 10, kind: input, shape index: {}]
  %s11 = inlined_call_operand.vmem [shape: f32[64,32], index: 11, kind: input, shape index: {}]
  %s12 = inlined_call_operand.vmem [shape: f32[1,32], index: 12, kind: input, shape index: {}]
  %s13 = inlined_call_operand.vmem [shape: f32[96,64], index: 13, kind: input, shape index: {}]
  %s14 = inlined_call_operand.vmem [shape: f32[1,64], index: 14, kind: input, shape index: {}]
  %s15 = inlined_call_operand.vmem [shape: f32[96,64], index: 15, kind: input, shape index: {}]
  %s16 = inlined_call_operand.vmem [shape: f32[1,64], index: 16, kind: input, shape index: {}]
  %s17 = inlined_call_operand.vmem [shape: f32[64,128], index: 17, kind: input, shape index: {}]
  %s18 = inlined_call_operand.vmem [shape: f32[1,128], index: 18, kind: input, shape index: {}]
  %s19 = inlined_call_operand.hbm [shape: f32[2,128], index: 19, kind: output, shape index: {}]
  %s20 = sld [smem:[#allocation0]]
  $region86: #{gcm_forward.3} parent=0
    _
  %s22 = ssub.s32 1, %s20
  %s23 = scalar_select 0, %s22, %s20
  $region1: #{gcm_forward.3} parent=0
    #allocation2 [shape = 'u8[1024]{0}', space=vmem, size = 0x400, scoped, tag = 'output window, operand 0, single buffered']
    #allocation3 [shape = 's32[1]{0}', space=sflag, size = 0x4, scoped, tag = 'scoped memory for gcm_forward.3']
    %24 = vsyncpa [#allocation3], 0
    // Predicated region
    $region2: #{gcm_forward.3} parent=1 // pred_check
      _
    $region3: #{gcm_forward.3} parent=1 // pred_check_branch
      %26 = sbr.rel (0) target = $region5
    $region4: #{gcm_forward.3} parent=1 // pred_region
      _
    $region5: #{gcm_forward.3} parent=1 // pred_fallthru
      _
    // Predicated region
    $region6: #{gcm_forward.3} parent=1 // pred_check
      _
    $region7: #{gcm_forward.3} parent=1 // pred_check_branch
      %28 = sbr.rel (0) target = $region9
    $region8: #{gcm_forward.3} parent=1 // pred_region
      _
    $region9: #{gcm_forward.3} parent=1 // pred_fallthru
      _
    // Predicated region
    $region10: #{gcm_forward.3} parent=1 // pred_check
      _
    $region11: #{gcm_forward.3} parent=1 // pred_check_branch
      %30 = sbr.rel (0) target = $region13
    $region12: #{gcm_forward.3} parent=1 // pred_region
      _
    $region13: #{gcm_forward.3} parent=1 // pred_fallthru
      _
    // Predicated region
    $region14: #{gcm_forward.3} parent=1 // pred_check
      _
    $region15: #{gcm_forward.3} parent=1 // pred_check_branch
      %32 = sbr.rel (0) target = $region17
    $region16: #{gcm_forward.3} parent=1 // pred_region
      _
    $region17: #{gcm_forward.3} parent=1 // pred_fallthru
      _
    // Predicated region
    $region18: #{gcm_forward.3} parent=1 // pred_check
      _
    $region19: #{gcm_forward.3} parent=1 // pred_check_branch
      %34 = sbr.rel (0) target = $region21
    $region20: #{gcm_forward.3} parent=1 // pred_region
      _
    $region21: #{gcm_forward.3} parent=1 // pred_fallthru
      _
    // Predicated region
    $region22: #{gcm_forward.3} parent=1 // pred_check
      _
    $region23: #{gcm_forward.3} parent=1 // pred_check_branch
      %36 = sbr.rel (0) target = $region25
    $region24: #{gcm_forward.3} parent=1 // pred_region
      _
    $region25: #{gcm_forward.3} parent=1 // pred_fallthru
      _
    // Predicated region
    $region26: #{gcm_forward.3} parent=1 // pred_check
      _
    $region27: #{gcm_forward.3} parent=1 // pred_check_branch
      %38 = sbr.rel (0) target = $region29
    $region28: #{gcm_forward.3} parent=1 // pred_region
      _
    $region29: #{gcm_forward.3} parent=1 // pred_fallthru
      _
    // Predicated region
    $region30: #{gcm_forward.3} parent=1 // pred_check
      _
    $region31: #{gcm_forward.3} parent=1 // pred_check_branch
      %40 = sbr.rel (0) target = $region33
    $region32: #{gcm_forward.3} parent=1 // pred_region
      _
    $region33: #{gcm_forward.3} parent=1 // pred_fallthru
      _
    // Predicated region
    $region34: #{gcm_forward.3} parent=1 // pred_check
      _
    $region35: #{gcm_forward.3} parent=1 // pred_check_branch
      %42 = sbr.rel (0) target = $region37
    $region36: #{gcm_forward.3} parent=1 // pred_region
      _
    $region37: #{gcm_forward.3} parent=1 // pred_fallthru
      _
    // Predicated region
    $region38: #{gcm_forward.3} parent=1 // pred_check
      _
    $region39: #{gcm_forward.3} parent=1 // pred_check_branch
      %44 = sbr.rel (0) target = $region41
    $region40: #{gcm_forward.3} parent=1 // pred_region
      _
    $region41: #{gcm_forward.3} parent=1 // pred_fallthru
      _
    // Predicated region
    $region42: #{gcm_forward.3} parent=1 // pred_check
      _
    $region43: #{gcm_forward.3} parent=1 // pred_check_branch
      %46 = sbr.rel (0) target = $region45
    $region44: #{gcm_forward.3} parent=1 // pred_region
      _
    $region45: #{gcm_forward.3} parent=1 // pred_fallthru
      _
    // Predicated region
    $region46: #{gcm_forward.3} parent=1 // pred_check
      _
    $region47: #{gcm_forward.3} parent=1 // pred_check_branch
      %48 = sbr.rel (0) target = $region49
    $region48: #{gcm_forward.3} parent=1 // pred_region
      _
    $region49: #{gcm_forward.3} parent=1 // pred_fallthru
      _
    // Predicated region
    $region50: #{gcm_forward.3} parent=1 // pred_check
      _
    $region51: #{gcm_forward.3} parent=1 // pred_check_branch
      %50 = sbr.rel (0) target = $region53
    $region52: #{gcm_forward.3} parent=1 // pred_region
      _
    $region53: #{gcm_forward.3} parent=1 // pred_fallthru
      _
    // Predicated region
    $region54: #{gcm_forward.3} parent=1 // pred_check
      _
    $region55: #{gcm_forward.3} parent=1 // pred_check_branch
      %52 = sbr.rel (0) target = $region57
    $region56: #{gcm_forward.3} parent=1 // pred_region
      _
    $region57: #{gcm_forward.3} parent=1 // pred_fallthru
      _
    // Predicated region
    $region58: #{gcm_forward.3} parent=1 // pred_check
      _
    $region59: #{gcm_forward.3} parent=1 // pred_check_branch
      %54 = sbr.rel (0) target = $region61
    $region60: #{gcm_forward.3} parent=1 // pred_region
      _
    $region61: #{gcm_forward.3} parent=1 // pred_fallthru
      _
    // Predicated region
    $region62: #{gcm_forward.3} parent=1 // pred_check
      _
    $region63: #{gcm_forward.3} parent=1 // pred_check_branch
      %56 = sbr.rel (0) target = $region65
    $region64: #{gcm_forward.3} parent=1 // pred_region
      _
    $region65: #{gcm_forward.3} parent=1 // pred_fallthru
      _
    // Predicated region
    $region66: #{gcm_forward.3} parent=1 // pred_check
      _
    $region67: #{gcm_forward.3} parent=1 // pred_check_branch
      %58 = sbr.rel (0) target = $region69
    $region68: #{gcm_forward.3} parent=1 // pred_region
      _
    $region69: #{gcm_forward.3} parent=1 // pred_fallthru
      _
    // Predicated region
    $region70: #{gcm_forward.3} parent=1 // pred_check
      _
    $region71: #{gcm_forward.3} parent=1 // pred_check_branch
      %60 = sbr.rel (0) target = $region73
    $region72: #{gcm_forward.3} parent=1 // pred_region
      _
    $region73: #{gcm_forward.3} parent=1 // pred_fallthru
      _
    // Predicated region
    $region74: #{gcm_forward.3} parent=1 // pred_check
      _
    $region75: #{gcm_forward.3} parent=1 // pred_check_branch
      %62 = sbr.rel (0) target = $region77
    $region76: #{gcm_forward.3} parent=1 // pred_region
      _
    $region77: #{gcm_forward.3} parent=1 // pred_fallthru
      _
    %v63 = vld [vmem:[%s0] sm:$0xf]
    %v64 = vld [vmem:[%s0 + $0x4] sm:$0xf]
    %v65 = vld [vmem:[%s6] sm:$0xff]
    %v66 = vld [vmem:[%s6 + $0x8] sm:$0xff]
    %v67 = vld [vmem:[%s6 + $0x10] sm:$0xff]
    %v68 = vld [vmem:[%s6 + $0x18] sm:$0xff]
    %v69 = vld [vmem:[%s6 + $0x20] sm:$0xff]
    %v70 = vld [vmem:[%s6 + $0x28] sm:$0xff]
    %v71 = vld [vmem:[%s6 + $0x30] sm:$0xff]
    %v72 = vld [vmem:[%s6 + $0x38] sm:$0xff]
    %v73 = vld [vmem:[%s6 + $0x40] sm:$0xff]
    %v74 = vld [vmem:[%s6 + $0x48] sm:$0xff]
    %v75 = vld [vmem:[%s6 + $0x50] sm:$0xff]
    %v76 = vld [vmem:[%s6 + $0x58] sm:$0xff]
    %v77 = vld [vmem:[%s6 + $0x60] sm:$0xff]
    %v78 = vld [vmem:[%s6 + $0x68] sm:$0xff]
    %v79 = vld [vmem:[%s6 + $0x70] sm:$0xff]
    %v80 = vld [vmem:[%s6 + $0x78] sm:$0xff]
    %v83 = vcombine.low %v63, %v64
    %85 = vmatprep.subr.mxu0 0.0
    %86 = vmatpush1.msra.mxu0 %v65
    %87 = vmatprep.subr.mxu0 0.0
    %88 = vmatpush1.msra.mxu0 %v66
    %89 = vmatprep.subr.mxu0 0.0
    %90 = vmatpush1.msra.mxu0 %v67
    %91 = vmatprep.subr.mxu0 0.0
    %92 = vmatpush1.msra.mxu0 %v68
    %93 = vmatprep.subr.mxu0 0.0
    %94 = vmatpush1.msra.mxu0 %v69
    %95 = vmatprep.subr.mxu0 0.0
    %96 = vmatpush1.msra.mxu0 %v70
    %97 = vmatprep.subr.mxu0 0.0
    %98 = vmatpush1.msra.mxu0 %v71
    %99 = vmatprep.subr.mxu0 0.0
    %100 = vmatpush1.msra.mxu0 %v72
    %101 = vmatprep.subr.mxu0 0.0
    %102 = vmatpush1.msra.mxu0 %v73
    %103 = vmatprep.subr.mxu0 0.0
    %104 = vmatpush1.msra.mxu0 %v74
    %105 = vmatprep.subr.mxu0 0.0
    %106 = vmatpush1.msra.mxu0 %v75
    %107 = vmatprep.subr.mxu0 0.0
    %108 = vmatpush1.msra.mxu0 %v76
    %109 = vmatprep.subr.mxu0 0.0
    %110 = vmatpush1.msra.mxu0 %v77
    %111 = vmatprep.subr.mxu0 0.0
    %112 = vmatpush1.msra.mxu0 %v78
    %113 = vmatprep.subr.mxu0 0.0
    %114 = vmatpush1.msra.mxu0 %v79
    %115 = vmatprep.subr.mxu0 0.0
    %116 = vmatpush1.msra.mxu0 %v80
    %117 = vmatprep.subr.mxu0 0.0
    %118 = vmatpush1.msra.mxu0 0.0
    %119 = vmatprep.subr.mxu0 0.0
    %120 = vmatpush1.msra.mxu0 0.0
    %121 = vmatprep.subr.mxu0 0.0
    %122 = vmatpush1.msra.mxu0 0.0
    %123 = vmatprep.subr.mxu0 0.0
    %124 = vmatpush1.msra.mxu0 0.0
    %125 = vmatprep.subr.mxu0 0.0
    %126 = vmatpush1.msra.mxu0 0.0
    %127 = vmatprep.subr.mxu0 0.0
    %128 = vmatpush1.msra.mxu0 0.0
    %129 = vmatprep.subr.mxu0 0.0
    %130 = vmatpush1.msra.mxu0 0.0
    %131 = vmatprep.subr.mxu0 0.0
    %132 = vmatpush1.msra.mxu0 0.0
    %133 = vmatprep.subr.mxu0 0.0
    %134 = vmatpush1.msra.mxu0 0.0
    %135 = vmatprep.subr.mxu0 0.0
    %136 = vmatpush1.msra.mxu0 0.0
    %137 = vmatprep.subr.mxu0 0.0
    %138 = vmatpush1.msra.mxu0 0.0
    %139 = vmatprep.subr.mxu0 0.0
    %140 = vmatpush1.msra.mxu0 0.0
    %141 = vmatprep.subr.mxu0 0.0
    %142 = vmatpush1.msra.mxu0 0.0
    %143 = vmatprep.subr.mxu0 0.0
    %144 = vmatpush1.msra.mxu0 0.0
    %145 = vmatprep.subr.mxu0 0.0
    %146 = vmatpush1.msra.mxu0 0.0
    %147 = vmatprep.subr.mxu0 0.0
    %148 = vmatpush1.msra.mxu0 0.0
    %149 = vmatprep.mubr.f32.mxu0 0.0
    %150 = vmatmul.mubr.f32.gmra.mrb[0].mxu0 %v83
    %v151 = vpop.f32.mrb[0].mxu0
    %v152 = vadd.f32 0.0, %v151
    %v153 = vpop.f32.mrb[0].mxu0
    %154 = vdwg.mxu0
    %v156 = vcombine.high %v152, %v152
    %v158 = vld [vmem:[%s7] sm:$0xff]
    %v159 = vld [vmem:[%s7 + $0x8] sm:$0xff]
    %v160 = vld [vmem:[%s7 + $0x10] sm:$0xff]
    %v161 = vld [vmem:[%s7 + $0x18] sm:$0xff]
    %v162 = vld [vmem:[%s8] sm:$0x1]
    %vm163 = vcmask 261120
    %v165 = vsel %vm163, 0.0, 0
    %167 = vmatprep.subr.mxu0 0.0
    %168 = vmatpush1.msra.mxu0 %v158
    %169 = vmatprep.subr.mxu0 0.0
    %170 = vmatpush1.msra.mxu0 %v159
    %171 = vmatprep.subr.mxu0 0.0
    %172 = vmatpush1.msra.mxu0 %v160
    %173 = vmatprep.subr.mxu0 0.0
    %174 = vmatpush1.msra.mxu0 %v161
    %175 = vmatprep.subr.mxu0 0.0
    %176 = vmatpush1.msra.mxu0 0.0
    %177 = vmatprep.subr.mxu0 0.0
    %178 = vmatpush1.msra.mxu0 0.0
    %179 = vmatprep.subr.mxu0 0.0
    %180 = vmatpush1.msra.mxu0 0.0
    %181 = vmatprep.subr.mxu0 0.0
    %182 = vmatpush1.msra.mxu0 0.0
    %183 = vmatprep.subr.mxu0 0.0
    %184 = vmatpush1.msra.mxu0 0.0
    %185 = vmatprep.subr.mxu0 0.0
    %186 = vmatpush1.msra.mxu0 0.0
    %187 = vmatprep.subr.mxu0 0.0
    %188 = vmatpush1.msra.mxu0 0.0
    %189 = vmatprep.subr.mxu0 0.0
    %190 = vmatpush1.msra.mxu0 0.0
    %191 = vmatprep.subr.mxu0 0.0
    %192 = vmatpush1.msra.mxu0 0.0
    %193 = vmatprep.subr.mxu0 0.0
    %194 = vmatpush1.msra.mxu0 0.0
    %195 = vmatprep.subr.mxu0 0.0
    %196 = vmatpush1.msra.mxu0 0.0
    %197 = vmatprep.subr.mxu0 0.0
    %198 = vmatpush1.msra.mxu0 0.0
    %199 = vmatprep.subr.mxu0 0.0
    %200 = vmatpush1.msra.mxu0 0.0
    %201 = vmatprep.subr.mxu0 0.0
    %202 = vmatpush1.msra.mxu0 0.0
    %203 = vmatprep.subr.mxu0 0.0
    %204 = vmatpush1.msra.mxu0 0.0
    %205 = vmatprep.subr.mxu0 0.0
    %206 = vmatpush1.msra.mxu0 0.0
    %207 = vmatprep.subr.mxu0 0.0
    %208 = vmatpush1.msra.mxu0 0.0
    %209 = vmatprep.subr.mxu0 0.0
    %210 = vmatpush1.msra.mxu0 0.0
    %211 = vmatprep.subr.mxu0 0.0
    %212 = vmatpush1.msra.mxu0 0.0
    %213 = vmatprep.subr.mxu0 0.0
    %214 = vmatpush1.msra.mxu0 0.0
    %215 = vmatprep.subr.mxu0 0.0
    %216 = vmatpush1.msra.mxu0 0.0
    %217 = vmatprep.subr.mxu0 0.0
    %218 = vmatpush1.msra.mxu0 0.0
    %219 = vmatprep.subr.mxu0 0.0
    %220 = vmatpush1.msra.mxu0 0.0
    %221 = vmatprep.subr.mxu0 0.0
    %222 = vmatpush1.msra.mxu0 0.0
    %223 = vmatprep.subr.mxu0 0.0
    %224 = vmatpush1.msra.mxu0 0.0
    %225 = vmatprep.subr.mxu0 0.0
    %226 = vmatpush1.msra.mxu0 0.0
    %227 = vmatprep.subr.mxu0 0.0
    %228 = vmatpush1.msra.mxu0 0.0
    %229 = vmatprep.subr.mxu0 0.0
    %230 = vmatpush1.msra.mxu0 0.0
    %231 = vmatprep.mubr.f32.mxu0 0.0
    %232 = vmatmul.mubr.f32.gmra.mrb[0].mxu0 %v165
    %v233 = vpop.f32.mrb[0].mxu0
    %v234 = vadd.f32 0.0, %v233
    %v235 = vpop.f32.mrb[0].mxu0
    %236 = vdwg.mxu0
    %v238 = vrot.slane %v234, 1
    %v241 = vadd.f32 %v152, %v234
    %v242 = vadd.f32 %v156, %v238
    %v244 = vlaneseq
    %v245 = vshrl.u32 %v244, 7
    %v246 = vsub.s32 0, %v245
    %v247 = vrot.slane %v162, %v246
    %v248 = vrot.slane %v247, 1
    %v251 = vadd.f32 %v241, %v247
    %v252 = vadd.f32 %v242, %v248
    %v253 = vxor.u32 %v251, 2147483648
    %v254 = vxor.u32 %v252, 2147483648
    %v255 = vmul.f32 %v253, 1.442695
    %v256 = vpow.pop %v255
    %v257 = vmul.f32 %v254, 1.442695
    %v258 = vpow.pop %v257
    %v259 = vadd.f32 %v256, 1.0
    %v260 = vadd.f32 %v258, 1.0
    %v261 = vrcp.pop %v259
    %v262 = vmul.f32 1.0, %v261
    %v263 = vrcp.pop %v260
    %v264 = vmul.f32 1.0, %v263
    %v265 = vtanh.pop %v251
    %v266 = vtanh.pop %v252
    %v267 = vmul.f32 %v262, 0.0
    %v268 = vmul.f32 %v264, 0.0
    %271 = vrot.lane.b32.xlu0 %v265, 64
    %v272 = vpop.permute.xlu0 %271
    %273 = vrot.lane.b32.xlu0 %v266, 64
    %v274 = vpop.permute.xlu0 %273
    %v277 = vmul.f32 %v262, %v272
    %v278 = vmul.f32 %v264, %v274
    %281 = vrot.lane.b32.xlu0 %v277, 32
    %v282 = vpop.permute.xlu0 %281
    %283 = vrot.lane.b32.xlu0 %v278, 32
    %v284 = vpop.permute.xlu0 %283
    %v287 = vadd.f32 %v267, %v282
    %v288 = vadd.f32 %v268, %v284
    %v289 = vtanh.pop %v287
    %v290 = vtanh.pop %v288
    %293 = vrot.lane.b32.xlu0 %v289, 64
    %v294 = vpop.permute.xlu0 %293
    %295 = vrot.lane.b32.xlu0 %v290, 64
    %v296 = vpop.permute.xlu0 %295
    %v299 = vmul.f32 %v262, %v294
    %v300 = vmul.f32 %v264, %v296
    %v303 = vlaneseq
    %v304 = vshrl.u32 %v303, 7
    %v305 = vsub.s32 0, %v304
    %v306 = vrot.slane %v299, %v305
    %v307 = vlaneseq
    %v308 = vshrl.u32 %v307, 7
    %v309 = vsub.s32 0, %v308
    %v310 = vrot.slane %v300, %v309
    %vm311 = vcmask 1041409
    %v312 = vsel %vm311, %v310, %v306
    %313 = vrot.lane.b32.xlu0 %v312, 32
    %v314 = vpop.permute.xlu0 %313
    %v315 = vsel %vm163, %v314, 0
    %317 = vmatprep.subr.mxu0 0.0
    %318 = vmatpush1.msra.mxu0 %v158
    %319 = vmatprep.subr.mxu0 0.0
    %320 = vmatpush1.msra.mxu0 %v159
    %321 = vmatprep.subr.mxu0 0.0
    %322 = vmatpush1.msra.mxu0 %v160
    %323 = vmatprep.subr.mxu0 0.0
    %324 = vmatpush1.msra.mxu0 %v161
    %325 = vmatprep.subr.mxu0 0.0
    %326 = vmatpush1.msra.mxu0 0.0
    %327 = vmatprep.subr.mxu0 0.0
    %328 = vmatpush1.msra.mxu0 0.0
    %329 = vmatprep.subr.mxu0 0.0
    %330 = vmatpush1.msra.mxu0 0.0
    %331 = vmatprep.subr.mxu0 0.0
    %332 = vmatpush1.msra.mxu0 0.0
    %333 = vmatprep.subr.mxu0 0.0
    %334 = vmatpush1.msra.mxu0 0.0
    %335 = vmatprep.subr.mxu0 0.0
    %336 = vmatpush1.msra.mxu0 0.0
    %337 = vmatprep.subr.mxu0 0.0
    %338 = vmatpush1.msra.mxu0 0.0
    %339 = vmatprep.subr.mxu0 0.0
    %340 = vmatpush1.msra.mxu0 0.0
    %341 = vmatprep.subr.mxu0 0.0
    %342 = vmatpush1.msra.mxu0 0.0
    %343 = vmatprep.subr.mxu0 0.0
    %344 = vmatpush1.msra.mxu0 0.0
    %345 = vmatprep.subr.mxu0 0.0
    %346 = vmatpush1.msra.mxu0 0.0
    %347 = vmatprep.subr.mxu0 0.0
    %348 = vmatpush1.msra.mxu0 0.0
    %349 = vmatprep.subr.mxu0 0.0
    %350 = vmatpush1.msra.mxu0 0.0
    %351 = vmatprep.subr.mxu0 0.0
    %352 = vmatpush1.msra.mxu0 0.0
    %353 = vmatprep.subr.mxu0 0.0
    %354 = vmatpush1.msra.mxu0 0.0
    %355 = vmatprep.subr.mxu0 0.0
    %356 = vmatpush1.msra.mxu0 0.0
    %357 = vmatprep.subr.mxu0 0.0
    %358 = vmatpush1.msra.mxu0 0.0
    %359 = vmatprep.subr.mxu0 0.0
    %360 = vmatpush1.msra.mxu0 0.0
    %361 = vmatprep.subr.mxu0 0.0
    %362 = vmatpush1.msra.mxu0 0.0
    %363 = vmatprep.subr.mxu0 0.0
    %364 = vmatpush1.msra.mxu0 0.0
    %365 = vmatprep.subr.mxu0 0.0
    %366 = vmatpush1.msra.mxu0 0.0
    %367 = vmatprep.subr.mxu0 0.0
    %368 = vmatpush1.msra.mxu0 0.0
    %369 = vmatprep.subr.mxu0 0.0
    %370 = vmatpush1.msra.mxu0 0.0
    %371 = vmatprep.subr.mxu0 0.0
    %372 = vmatpush1.msra.mxu0 0.0
    %373 = vmatprep.subr.mxu0 0.0
    %374 = vmatpush1.msra.mxu0 0.0
    %375 = vmatprep.subr.mxu0 0.0
    %376 = vmatpush1.msra.mxu0 0.0
    %377 = vmatprep.subr.mxu0 0.0
    %378 = vmatpush1.msra.mxu0 0.0
    %379 = vmatprep.subr.mxu0 0.0
    %380 = vmatpush1.msra.mxu0 0.0
    %381 = vmatprep.mubr.f32.mxu0 0.0
    %382 = vmatmul.mubr.f32.gmra.mrb[0].mxu0 %v315
    %v383 = vpop.f32.mrb[0].mxu0
    %v384 = vadd.f32 0.0, %v383
    %v385 = vpop.f32.mrb[0].mxu0
    %386 = vdwg.mxu0
    %v388 = vrot.slane %v384, 7
    %v391 = vadd.f32 %v152, %v388
    %v392 = vadd.f32 %v156, %v384
    %v393 = vrot.slane %v247, 7
    %v395 = vadd.f32 %v391, %v393
    %v396 = vadd.f32 %v392, %v247
    %v397 = vxor.u32 %v395, 2147483648
    %v398 = vxor.u32 %v396, 2147483648
    %v399 = vmul.f32 %v397, 1.442695
    %v400 = vpow.pop %v399
    %v401 = vmul.f32 %v398, 1.442695
    %v402 = vpow.pop %v401
    %v403 = vadd.f32 %v400, 1.0
    %v404 = vadd.f32 %v402, 1.0
    %v405 = vrcp.pop %v403
    %v406 = vmul.f32 1.0, %v405
    %v407 = vrcp.pop %v404
    %v408 = vmul.f32 1.0, %v407
    %v409 = vtanh.pop %v395
    %v410 = vtanh.pop %v396
    %v413 = vrot.slane %v287, 7
    %v414 = vrot.slane %v288, 7
    %v417 = vmul.f32 %v406, %v413
    %v418 = vmul.f32 %v408, %v414
    %421 = vrot.lane.b32.xlu0 %v409, 64
    %v422 = vpop.permute.xlu0 %421
    %423 = vrot.lane.b32.xlu0 %v410, 64
    %v424 = vpop.permute.xlu0 %423
    %v427 = vmul.f32 %v406, %v422
    %v428 = vmul.f32 %v408, %v424
    %431 = vrot.lane.b32.xlu0 %v427, 32
    %v432 = vpop.permute.xlu0 %431
    %433 = vrot.lane.b32.xlu0 %v428, 32
    %v434 = vpop.permute.xlu0 %433
    %v437 = vadd.f32 %v417, %v432
    %v438 = vadd.f32 %v418, %v434
    %v439 = vtanh.pop %v437
    %v440 = vtanh.pop %v438
    %443 = vrot.lane.b32.xlu0 %v439, 64
    %v444 = vpop.permute.xlu0 %443
    %445 = vrot.lane.b32.xlu0 %v440, 64
    %v446 = vpop.permute.xlu0 %445
    %v449 = vmul.f32 %v406, %v444
    %v450 = vmul.f32 %v408, %v446
    %v453 = vlaneseq
    %v454 = vshrl.u32 %v453, 7
    %v455 = vsub.s32 1, %v454
    %v456 = vrot.slane %v449, %v455
    %v457 = vlaneseq
    %v458 = vshrl.u32 %v457, 7
    %v459 = vsub.s32 1, %v458
    %v460 = vrot.slane %v450, %v459
    %v461 = vsel %vm311, %v460, %v456
    %462 = vrot.lane.b32.xlu0 %v461, 32
    %v463 = vpop.permute.xlu0 %462
    %v464 = vsel %vm163, %v463, 0
    %466 = vmatprep.subr.mxu0 0.0
    %467 = vmatpush1.msra.mxu0 %v158
    %468 = vmatprep.subr.mxu0 0.0
    %469 = vmatpush1.msra.mxu0 %v159
    %470 = vmatprep.subr.mxu0 0.0
    %471 = vmatpush1.msra.mxu0 %v160
    %472 = vmatprep.subr.mxu0 0.0
    %473 = vmatpush1.msra.mxu0 %v161
    %474 = vmatprep.subr.mxu0 0.0
    %475 = vmatpush1.msra.mxu0 0.0
    %476 = vmatprep.subr.mxu0 0.0
    %477 = vmatpush1.msra.mxu0 0.0
    %478 = vmatprep.subr.mxu0 0.0
    %479 = vmatpush1.msra.mxu0 0.0
    %480 = vmatprep.subr.mxu0 0.0
    %481 = vmatpush1.msra.mxu0 0.0
    %482 = vmatprep.subr.mxu0 0.0
    %483 = vmatpush1.msra.mxu0 0.0
    %484 = vmatprep.subr.mxu0 0.0
    %485 = vmatpush1.msra.mxu0 0.0
    %486 = vmatprep.subr.mxu0 0.0
    %487 = vmatpush1.msra.mxu0 0.0
    %488 = vmatprep.subr.mxu0 0.0
    %489 = vmatpush1.msra.mxu0 0.0
    %490 = vmatprep.subr.mxu0 0.0
    %491 = vmatpush1.msra.mxu0 0.0
    %492 = vmatprep.subr.mxu0 0.0
    %493 = vmatpush1.msra.mxu0 0.0
    %494 = vmatprep.subr.mxu0 0.0
    %495 = vmatpush1.msra.mxu0 0.0
    %496 = vmatprep.subr.mxu0 0.0
    %497 = vmatpush1.msra.mxu0 0.0
    %498 = vmatprep.subr.mxu0 0.0
    %499 = vmatpush1.msra.mxu0 0.0
    %500 = vmatprep.subr.mxu0 0.0
    %501 = vmatpush1.msra.mxu0 0.0
    %502 = vmatprep.subr.mxu0 0.0
    %503 = vmatpush1.msra.mxu0 0.0
    %504 = vmatprep.subr.mxu0 0.0
    %505 = vmatpush1.msra.mxu0 0.0
    %506 = vmatprep.subr.mxu0 0.0
    %507 = vmatpush1.msra.mxu0 0.0
    %508 = vmatprep.subr.mxu0 0.0
    %509 = vmatpush1.msra.mxu0 0.0
    %510 = vmatprep.subr.mxu0 0.0
    %511 = vmatpush1.msra.mxu0 0.0
    %512 = vmatprep.subr.mxu0 0.0
    %513 = vmatpush1.msra.mxu0 0.0
    %514 = vmatprep.subr.mxu0 0.0
    %515 = vmatpush1.msra.mxu0 0.0
    %516 = vmatprep.subr.mxu0 0.0
    %517 = vmatpush1.msra.mxu0 0.0
    %518 = vmatprep.subr.mxu0 0.0
    %519 = vmatpush1.msra.mxu0 0.0
    %520 = vmatprep.subr.mxu0 0.0
    %521 = vmatpush1.msra.mxu0 0.0
    %522 = vmatprep.subr.mxu0 0.0
    %523 = vmatpush1.msra.mxu0 0.0
    %524 = vmatprep.subr.mxu0 0.0
    %525 = vmatpush1.msra.mxu0 0.0
    %526 = vmatprep.subr.mxu0 0.0
    %527 = vmatpush1.msra.mxu0 0.0
    %528 = vmatprep.subr.mxu0 0.0
    %529 = vmatpush1.msra.mxu0 0.0
    %530 = vmatprep.mubr.f32.mxu0 0.0
    %531 = vmatmul.mubr.f32.gmra.mrb[0].mxu0 %v464
    %v532 = vpop.f32.mrb[0].mxu0
    %v533 = vadd.f32 0.0, %v532
    %v534 = vpop.f32.mrb[0].mxu0
    %535 = vdwg.mxu0
    %v537 = vrot.slane %v533, 6
    %v538 = vrot.slane %v533, 7
    %v541 = vadd.f32 %v152, %v537
    %v542 = vadd.f32 %v156, %v538
    %v543 = vrot.slane %v247, 6
    %v545 = vadd.f32 %v541, %v543
    %v546 = vadd.f32 %v542, %v393
    %v547 = vxor.u32 %v545, 2147483648
    %v548 = vxor.u32 %v546, 2147483648
    %v549 = vmul.f32 %v547, 1.442695
    %v550 = vpow.pop %v549
    %v551 = vmul.f32 %v548, 1.442695
    %v552 = vpow.pop %v551
    %v553 = vadd.f32 %v550, 1.0
    %v554 = vadd.f32 %v552, 1.0
    %v555 = vrcp.pop %v553
    %v556 = vmul.f32 1.0, %v555
    %v557 = vrcp.pop %v554
    %v558 = vmul.f32 1.0, %v557
    %v559 = vtanh.pop %v545
    %v560 = vtanh.pop %v546
    %v563 = vrot.slane %v437, 7
    %v564 = vrot.slane %v438, 7
    %v567 = vmul.f32 %v556, %v563
    %v568 = vmul.f32 %v558, %v564
    %571 = vrot.lane.b32.xlu0 %v559, 64
    %v572 = vpop.permute.xlu0 %571
    %573 = vrot.lane.b32.xlu0 %v560, 64
    %v574 = vpop.permute.xlu0 %573
    %v577 = vmul.f32 %v556, %v572
    %v578 = vmul.f32 %v558, %v574
    %581 = vrot.lane.b32.xlu0 %v577, 32
    %v582 = vpop.permute.xlu0 %581
    %583 = vrot.lane.b32.xlu0 %v578, 32
    %v584 = vpop.permute.xlu0 %583
    %v587 = vadd.f32 %v567, %v582
    %v588 = vadd.f32 %v568, %v584
    %v589 = vtanh.pop %v587
    %v590 = vtanh.pop %v588
    %593 = vrot.lane.b32.xlu0 %v589, 64
    %v594 = vpop.permute.xlu0 %593
    %595 = vrot.lane.b32.xlu0 %v590, 64
    %v596 = vpop.permute.xlu0 %595
    %v599 = vmul.f32 %v556, %v594
    %v600 = vmul.f32 %v558, %v596
    %v603 = vlaneseq
    %v604 = vshrl.u32 %v603, 7
    %v605 = vsub.s32 2, %v604
    %v606 = vrot.slane %v599, %v605
    %v607 = vlaneseq
    %v608 = vshrl.u32 %v607, 7
    %v609 = vsub.s32 2, %v608
    %v610 = vrot.slane %v600, %v609
    %v611 = vsel %vm311, %v610, %v606
    %612 = vrot.lane.b32.xlu0 %v611, 32
    %v613 = vpop.permute.xlu0 %612
    %v614 = vsel %vm163, %v613, 0
    %616 = vmatprep.subr.mxu0 0.0
    %617 = vmatpush1.msra.mxu0 %v158
    %618 = vmatprep.subr.mxu0 0.0
    %619 = vmatpush1.msra.mxu0 %v159
    %620 = vmatprep.subr.mxu0 0.0
    %621 = vmatpush1.msra.mxu0 %v160
    %622 = vmatprep.subr.mxu0 0.0
    %623 = vmatpush1.msra.mxu0 %v161
    %624 = vmatprep.subr.mxu0 0.0
    %625 = vmatpush1.msra.mxu0 0.0
    %626 = vmatprep.subr.mxu0 0.0
    %627 = vmatpush1.msra.mxu0 0.0
    %628 = vmatprep.subr.mxu0 0.0
    %629 = vmatpush1.msra.mxu0 0.0
    %630 = vmatprep.subr.mxu0 0.0
    %631 = vmatpush1.msra.mxu0 0.0
    %632 = vmatprep.subr.mxu0 0.0
    %633 = vmatpush1.msra.mxu0 0.0
    %634 = vmatprep.subr.mxu0 0.0
    %635 = vmatpush1.msra.mxu0 0.0
    %636 = vmatprep.subr.mxu0 0.0
    %637 = vmatpush1.msra.mxu0 0.0
    %638 = vmatprep.subr.mxu0 0.0
    %639 = vmatpush1.msra.mxu0 0.0
    %640 = vmatprep.subr.mxu0 0.0
    %641 = vmatpush1.msra.mxu0 0.0
    %642 = vmatprep.subr.mxu0 0.0
    %643 = vmatpush1.msra.mxu0 0.0
    %644 = vmatprep.subr.mxu0 0.0
    %645 = vmatpush1.msra.mxu0 0.0
    %646 = vmatprep.subr.mxu0 0.0
    %647 = vmatpush1.msra.mxu0 0.0
    %648 = vmatprep.subr.mxu0 0.0
    %649 = vmatpush1.msra.mxu0 0.0
    %650 = vmatprep.subr.mxu0 0.0
    %651 = vmatpush1.msra.mxu0 0.0
    %652 = vmatprep.subr.mxu0 0.0
    %653 = vmatpush1.msra.mxu0 0.0
    %654 = vmatprep.subr.mxu0 0.0
    %655 = vmatpush1.msra.mxu0 0.0
    %656 = vmatprep.subr.mxu0 0.0
    %657 = vmatpush1.msra.mxu0 0.0
    %658 = vmatprep.subr.mxu0 0.0
    %659 = vmatpush1.msra.mxu0 0.0
    %660 = vmatprep.subr.mxu0 0.0
    %661 = vmatpush1.msra.mxu0 0.0
    %662 = vmatprep.subr.mxu0 0.0
    %663 = vmatpush1.msra.mxu0 0.0
    %664 = vmatprep.subr.mxu0 0.0
    %665 = vmatpush1.msra.mxu0 0.0
    %666 = vmatprep.subr.mxu0 0.0
    %667 = vmatpush1.msra.mxu0 0.0
    %668 = vmatprep.subr.mxu0 0.0
    %669 = vmatpush1.msra.mxu0 0.0
    %670 = vmatprep.subr.mxu0 0.0
    %671 = vmatpush1.msra.mxu0 0.0
    %672 = vmatprep.subr.mxu0 0.0
    %673 = vmatpush1.msra.mxu0 0.0
    %674 = vmatprep.subr.mxu0 0.0
    %675 = vmatpush1.msra.mxu0 0.0
    %676 = vmatprep.subr.mxu0 0.0
    %677 = vmatpush1.msra.mxu0 0.0
    %678 = vmatprep.subr.mxu0 0.0
    %679 = vmatpush1.msra.mxu0 0.0
    %680 = vmatprep.mubr.f32.mxu0 0.0
    %681 = vmatmul.mubr.f32.gmra.mrb[0].mxu0 %v614
    %v682 = vpop.f32.mrb[0].mxu0
    %v683 = vadd.f32 0.0, %v682
    %v684 = vpop.f32.mrb[0].mxu0
    %685 = vdwg.mxu0
    %v687 = vrot.slane %v683, 5
    %v688 = vrot.slane %v683, 6
    %v691 = vadd.f32 %v152, %v687
    %v692 = vadd.f32 %v156, %v688
    %v693 = vrot.slane %v247, 5
    %v695 = vadd.f32 %v691, %v693
    %v696 = vadd.f32 %v692, %v543
    %v697 = vxor.u32 %v695, 2147483648
    %v698 = vxor.u32 %v696, 2147483648
    %v699 = vmul.f32 %v697, 1.442695
    %v700 = vpow.pop %v699
    %v701 = vmul.f32 %v698, 1.442695
    %v702 = vpow.pop %v701
    %v703 = vadd.f32 %v700, 1.0
    %v704 = vadd.f32 %v702, 1.0
    %v705 = vrcp.pop %v703
    %v706 = vmul.f32 1.0, %v705
    %v707 = vrcp.pop %v704
    %v708 = vmul.f32 1.0, %v707
    %v709 = vtanh.pop %v695
    %v710 = vtanh.pop %v696
    %v713 = vrot.slane %v587, 7
    %v714 = vrot.slane %v588, 7
    %v717 = vmul.f32 %v706, %v713
    %v718 = vmul.f32 %v708, %v714
    %721 = vrot.lane.b32.xlu0 %v709, 64
    %v722 = vpop.permute.xlu0 %721
    %723 = vrot.lane.b32.xlu0 %v710, 64
    %v724 = vpop.permute.xlu0 %723
    %v727 = vmul.f32 %v706, %v722
    %v728 = vmul.f32 %v708, %v724
    %731 = vrot.lane.b32.xlu0 %v727, 32
    %v732 = vpop.permute.xlu0 %731
    %733 = vrot.lane.b32.xlu0 %v728, 32
    %v734 = vpop.permute.xlu0 %733
    %v737 = vadd.f32 %v717, %v732
    %v738 = vadd.f32 %v718, %v734
    %v739 = vtanh.pop %v737
    %v740 = vtanh.pop %v738
    %743 = vrot.lane.b32.xlu0 %v739, 64
    %v744 = vpop.permute.xlu0 %743
    %745 = vrot.lane.b32.xlu0 %v740, 64
    %v746 = vpop.permute.xlu0 %745
    %v749 = vmul.f32 %v706, %v744
    %v750 = vmul.f32 %v708, %v746
    %v751 = vld [vmem:[%s10] sm:$0xff]
    %v752 = vld [vmem:[%s10 + $0x8] sm:$0xff]
    %v753 = vld [vmem:[%s10 + $0x10] sm:$0xff]
    %v754 = vld [vmem:[%s10 + $0x18] sm:$0xff]
    %v757 = vlaneseq
    %v758 = vshrl.u32 %v757, 7
    %v759 = vsub.s32 3, %v758
    %v760 = vrot.slane %v749, %v759
    %v761 = vlaneseq
    %v762 = vshrl.u32 %v761, 7
    %v763 = vsub.s32 3, %v762
    %v764 = vrot.slane %v750, %v763
    %v765 = vsel %vm311, %v764, %v760
    %766 = vrot.lane.b32.xlu0 %v765, 32
    %v767 = vpop.permute.xlu0 %766
    %v768 = vsel %vm163, %v767, 0
    %770 = vmatprep.subr.mxu0 0.0
    %771 = vmatpush1.msra.mxu0 %v751
    %772 = vmatprep.subr.mxu0 0.0
    %773 = vmatpush1.msra.mxu0 %v752
    %774 = vmatprep.subr.mxu0 0.0
    %775 = vmatpush1.msra.mxu0 %v753
    %776 = vmatprep.subr.mxu0 0.0
    %777 = vmatpush1.msra.mxu0 %v754
    %778 = vmatprep.subr.mxu0 0.0
    %779 = vmatpush1.msra.mxu0 0.0
    %780 = vmatprep.subr.mxu0 0.0
    %781 = vmatpush1.msra.mxu0 0.0
    %782 = vmatprep.subr.mxu0 0.0
    %783 = vmatpush1.msra.mxu0 0.0
    %784 = vmatprep.subr.mxu0 0.0
    %785 = vmatpush1.msra.mxu0 0.0
    %786 = vmatprep.subr.mxu0 0.0
    %787 = vmatpush1.msra.mxu0 0.0
    %788 = vmatprep.subr.mxu0 0.0
    %789 = vmatpush1.msra.mxu0 0.0
    %790 = vmatprep.subr.mxu0 0.0
    %791 = vmatpush1.msra.mxu0 0.0
    %792 = vmatprep.subr.mxu0 0.0
    %793 = vmatpush1.msra.mxu0 0.0
    %794 = vmatprep.subr.mxu0 0.0
    %795 = vmatpush1.msra.mxu0 0.0
    %796 = vmatprep.subr.mxu0 0.0
    %797 = vmatpush1.msra.mxu0 0.0
    %798 = vmatprep.subr.mxu0 0.0
    %799 = vmatpush1.msra.mxu0 0.0
    %800 = vmatprep.subr.mxu0 0.0
    %801 = vmatpush1.msra.mxu0 0.0
    %802 = vmatprep.subr.mxu0 0.0
    %803 = vmatpush1.msra.mxu0 0.0
    %804 = vmatprep.subr.mxu0 0.0
    %805 = vmatpush1.msra.mxu0 0.0
    %806 = vmatprep.subr.mxu0 0.0
    %807 = vmatpush1.msra.mxu0 0.0
    %808 = vmatprep.subr.mxu0 0.0
    %809 = vmatpush1.msra.mxu0 0.0
    %810 = vmatprep.subr.mxu0 0.0
    %811 = vmatpush1.msra.mxu0 0.0
    %812 = vmatprep.subr.mxu0 0.0
    %813 = vmatpush1.msra.mxu0 0.0
    %814 = vmatprep.subr.mxu0 0.0
    %815 = vmatpush1.msra.mxu0 0.0
    %816 = vmatprep.subr.mxu0 0.0
    %817 = vmatpush1.msra.mxu0 0.0
    %818 = vmatprep.subr.mxu0 0.0
    %819 = vmatpush1.msra.mxu0 0.0
    %820 = vmatprep.subr.mxu0 0.0
    %821 = vmatpush1.msra.mxu0 0.0
    %822 = vmatprep.subr.mxu0 0.0
    %823 = vmatpush1.msra.mxu0 0.0
    %824 = vmatprep.subr.mxu0 0.0
    %825 = vmatpush1.msra.mxu0 0.0
    %826 = vmatprep.subr.mxu0 0.0
    %827 = vmatpush1.msra.mxu0 0.0
    %828 = vmatprep.subr.mxu0 0.0
    %829 = vmatpush1.msra.mxu0 0.0
    %830 = vmatprep.subr.mxu0 0.0
    %831 = vmatpush1.msra.mxu0 0.0
    %832 = vmatprep.subr.mxu0 0.0
    %833 = vmatpush1.msra.mxu0 0.0
    %834 = vmatprep.mubr.f32.mxu0 0.0
    %835 = vmatmul.mubr.f32.gmra.mrb[0].mxu0 %v768
    %v836 = vpop.f32.mrb[0].mxu0
    %v837 = vadd.f32 0.0, %v836
    %v838 = vpop.f32.mrb[0].mxu0
    %839 = vdwg.mxu0
    %v840 = vmax.f32 %v837, 1e-08
    %v841 = vlog2.pop %v840
    %v842 = vmul.f32 %v841, 0.6931472
    %v843 = vld [vmem:[%s3] sm:$0x3]
    %v844 = vadd.f32 %v842, %v843
    %vm845 = vcmask 41984
    %v846 = vsel %vm845, %v844, -inf
    %847 = vmax.xlane.f32.xlu0 %v846
    %v848 = vpop.xlane.xlu0 %847
    %v849 = vlaneseq
    %v850 = vand.u32 %v849, 127
    %vm851 = vcmp.ge.f32.partialorder %v844, %v848
    %v852 = vsel %vm851, %v850, 6
    %v853 = vsel %vm845, %v852, 2147483647
    %v854 = vand.u32 %v853, 65535
    %v855 = vshra.s32 %v853, 16
    %v856 = vcvt.s32.f32 %v854
    %v857 = vcvt.s32.f32 %v855
    %858 = vmin.xlane.f32.xlu0 %v857
    %v859 = vpop.xlane.xlu0 %858
    %vm860 = vcmp.eq.f32.partialorder %v857, %v859
    %v861 = vsel %vm860, %v856, inf
    %862 = vmin.xlane.f32.xlu0 %v861
    %v863 = vpop.xlane.xlu0 %862
    %v864 = vcvt.f32.s32 %v863
    %v865 = vcvt.f32.s32 %v859
    %v866 = vshll.u32 %v865, 16
    %v867 = vadd.s32 %v866, %v864
    %vm868 = vcmp.eq.s32.totalorder %v850, %v867
    %v869 = vsel %vm868, 1, 0
    %v870 = vcvt.s32.f32 %v869
    %v871 = vld [vmem:[%s9] sm:$0x3f]
    %vm872 = vcmask 48128
    %v874 = vsel %vm872, %v870, 0
    %vm876 = vcmask 1045504
    %v878 = vsel %vm876, %v871, 0
    %880 = vmatprep.subr.mxu0 0.0
    %881 = vmatpush1.msra.mxu0 %v878
    %882 = vmatprep.subr.mxu0 0.0
    %883 = vmatpush1.msra.mxu0 0.0
    %884 = vmatprep.subr.mxu0 0.0
    %885 = vmatpush1.msra.mxu0 0.0
    %886 = vmatprep.subr.mxu0 0.0
    %887 = vmatpush1.msra.mxu0 0.0
    %888 = vmatprep.subr.mxu0 0.0
    %889 = vmatpush1.msra.mxu0 0.0
    %890 = vmatprep.subr.mxu0 0.0
    %891 = vmatpush1.msra.mxu0 0.0
    %892 = vmatprep.subr.mxu0 0.0
    %893 = vmatpush1.msra.mxu0 0.0
    %894 = vmatprep.subr.mxu0 0.0
    %895 = vmatpush1.msra.mxu0 0.0
    %896 = vmatprep.subr.mxu0 0.0
    %897 = vmatpush1.msra.mxu0 0.0
    %898 = vmatprep.subr.mxu0 0.0
    %899 = vmatpush1.msra.mxu0 0.0
    %900 = vmatprep.subr.mxu0 0.0
    %901 = vmatpush1.msra.mxu0 0.0
    %902 = vmatprep.subr.mxu0 0.0
    %903 = vmatpush1.msra.mxu0 0.0
    %904 = vmatprep.subr.mxu0 0.0
    %905 = vmatpush1.msra.mxu0 0.0
    %906 = vmatprep.subr.mxu0 0.0
    %907 = vmatpush1.msra.mxu0 0.0
    %908 = vmatprep.subr.mxu0 0.0
    %909 = vmatpush1.msra.mxu0 0.0
    %910 = vmatprep.subr.mxu0 0.0
    %911 = vmatpush1.msra.mxu0 0.0
    %912 = vmatprep.subr.mxu0 0.0
    %913 = vmatpush1.msra.mxu0 0.0
    %914 = vmatprep.subr.mxu0 0.0
    %915 = vmatpush1.msra.mxu0 0.0
    %916 = vmatprep.subr.mxu0 0.0
    %917 = vmatpush1.msra.mxu0 0.0
    %918 = vmatprep.subr.mxu0 0.0
    %919 = vmatpush1.msra.mxu0 0.0
    %920 = vmatprep.subr.mxu0 0.0
    %921 = vmatpush1.msra.mxu0 0.0
    %922 = vmatprep.subr.mxu0 0.0
    %923 = vmatpush1.msra.mxu0 0.0
    %924 = vmatprep.subr.mxu0 0.0
    %925 = vmatpush1.msra.mxu0 0.0
    %926 = vmatprep.subr.mxu0 0.0
    %927 = vmatpush1.msra.mxu0 0.0
    %928 = vmatprep.subr.mxu0 0.0
    %929 = vmatpush1.msra.mxu0 0.0
    %930 = vmatprep.subr.mxu0 0.0
    %931 = vmatpush1.msra.mxu0 0.0
    %932 = vmatprep.subr.mxu0 0.0
    %933 = vmatpush1.msra.mxu0 0.0
    %934 = vmatprep.subr.mxu0 0.0
    %935 = vmatpush1.msra.mxu0 0.0
    %936 = vmatprep.subr.mxu0 0.0
    %937 = vmatpush1.msra.mxu0 0.0
    %938 = vmatprep.subr.mxu0 0.0
    %939 = vmatpush1.msra.mxu0 0.0
    %940 = vmatprep.subr.mxu0 0.0
    %941 = vmatpush1.msra.mxu0 0.0
    %942 = vmatprep.subr.mxu0 0.0
    %943 = vmatpush1.msra.mxu0 0.0
    %944 = vmatprep.mubr.f32.mxu0 0.0
    %945 = vmatmul.mubr.f32.gmra.mrb[0].mxu0 %v874
    %v946 = vpop.f32.mrb[0].mxu0
    %v947 = vadd.f32 0.0, %v946
    %v948 = vpop.f32.mrb[0].mxu0
    %949 = vdwg.mxu0
    %v950 = vld [vmem:[%s11] sm:$0xff]
    %v951 = vld [vmem:[%s11 + $0x8] sm:$0xff]
    %v952 = vld [vmem:[%s11 + $0x10] sm:$0xff]
    %v953 = vld [vmem:[%s11 + $0x18] sm:$0xff]
    %v954 = vld [vmem:[%s11 + $0x20] sm:$0xff]
    %v955 = vld [vmem:[%s11 + $0x28] sm:$0xff]
    %v956 = vld [vmem:[%s11 + $0x30] sm:$0xff]
    %v957 = vld [vmem:[%s11 + $0x38] sm:$0xff]
    %v958 = vld [vmem:[%s12] sm:$0x1]
    %v959 = vld [vmem:[%s1] sm:$0x3]
    %v961 = vlaneseq
    %v962 = vshrl.u32 %v961, 7
    %v963 = vsub.s32 0, %v962
    %v964 = vrot.slane %v958, %v963
    %vm966 = vcmask 523264
    %v968 = vsel %vm966, %v959, 0
    %970 = vmatprep.subr.mxu0 0.0
    %971 = vmatpush1.msra.mxu0 %v950
    %972 = vmatprep.subr.mxu0 0.0
    %973 = vmatpush1.msra.mxu0 %v951
    %974 = vmatprep.subr.mxu0 0.0
    %975 = vmatpush1.msra.mxu0 %v952
    %976 = vmatprep.subr.mxu0 0.0
    %977 = vmatpush1.msra.mxu0 %v953
    %978 = vmatprep.subr.mxu0 0.0
    %979 = vmatpush1.msra.mxu0 %v954
    %980 = vmatprep.subr.mxu0 0.0
    %981 = vmatpush1.msra.mxu0 %v955
    %982 = vmatprep.subr.mxu0 0.0
    %983 = vmatpush1.msra.mxu0 %v956
    %984 = vmatprep.subr.mxu0 0.0
    %985 = vmatpush1.msra.mxu0 %v957
    %986 = vmatprep.subr.mxu0 0.0
    %987 = vmatpush1.msra.mxu0 0.0
    %988 = vmatprep.subr.mxu0 0.0
    %989 = vmatpush1.msra.mxu0 0.0
    %990 = vmatprep.subr.mxu0 0.0
    %991 = vmatpush1.msra.mxu0 0.0
    %992 = vmatprep.subr.mxu0 0.0
    %993 = vmatpush1.msra.mxu0 0.0
    %994 = vmatprep.subr.mxu0 0.0
    %995 = vmatpush1.msra.mxu0 0.0
    %996 = vmatprep.subr.mxu0 0.0
    %997 = vmatpush1.msra.mxu0 0.0
    %998 = vmatprep.subr.mxu0 0.0
    %999 = vmatpush1.msra.mxu0 0.0
    %1000 = vmatprep.subr.mxu0 0.0
    %1001 = vmatpush1.msra.mxu0 0.0
    %1002 = vmatprep.subr.mxu0 0.0
    %1003 = vmatpush1.msra.mxu0 0.0
    %1004 = vmatprep.subr.mxu0 0.0
    %1005 = vmatpush1.msra.mxu0 0.0
    %1006 = vmatprep.subr.mxu0 0.0
    %1007 = vmatpush1.msra.mxu0 0.0
    %1008 = vmatprep.subr.mxu0 0.0
    %1009 = vmatpush1.msra.mxu0 0.0
    %1010 = vmatprep.subr.mxu0 0.0
    %1011 = vmatpush1.msra.mxu0 0.0
    %1012 = vmatprep.subr.mxu0 0.0
    %1013 = vmatpush1.msra.mxu0 0.0
    %1014 = vmatprep.subr.mxu0 0.0
    %1015 = vmatpush1.msra.mxu0 0.0
    %1016 = vmatprep.subr.mxu0 0.0
    %1017 = vmatpush1.msra.mxu0 0.0
    %1018 = vmatprep.subr.mxu0 0.0
    %1019 = vmatpush1.msra.mxu0 0.0
    %1020 = vmatprep.subr.mxu0 0.0
    %1021 = vmatpush1.msra.mxu0 0.0
    %1022 = vmatprep.subr.mxu0 0.0
    %1023 = vmatpush1.msra.mxu0 0.0
    %1024 = vmatprep.subr.mxu0 0.0
    %1025 = vmatpush1.msra.mxu0 0.0
    %1026 = vmatprep.subr.mxu0 0.0
    %1027 = vmatpush1.msra.mxu0 0.0
    %1028 = vmatprep.subr.mxu0 0.0
    %1029 = vmatpush1.msra.mxu0 0.0
    %1030 = vmatprep.subr.mxu0 0.0
    %1031 = vmatpush1.msra.mxu0 0.0
    %1032 = vmatprep.subr.mxu0 0.0
    %1033 = vmatpush1.msra.mxu0 0.0
    %1034 = vmatprep.mubr.f32.mxu0 0.0
    %1035 = vmatmul.mubr.f32.gmra.mrb[0].mxu0 %v968
    %v1036 = vpop.f32.mrb[0].mxu0
    %v1037 = vadd.f32 %v964, %v1036
    %v1038 = vpop.f32.mrb[0].mxu0
    %1039 = vdwg.mxu0
    %v1040 = vld [vmem:[%s2] sm:$0x3]
    %v1042 = vsel %vm966, %v1040, 0
    %1044 = vmatprep.subr.mxu0 0.0
    %1045 = vmatpush1.msra.mxu0 %v950
    %1046 = vmatprep.subr.mxu0 0.0
    %1047 = vmatpush1.msra.mxu0 %v951
    %1048 = vmatprep.subr.mxu0 0.0
    %1049 = vmatpush1.msra.mxu0 %v952
    %1050 = vmatprep.subr.mxu0 0.0
    %1051 = vmatpush1.msra.mxu0 %v953
    %1052 = vmatprep.subr.mxu0 0.0
    %1053 = vmatpush1.msra.mxu0 %v954
    %1054 = vmatprep.subr.mxu0 0.0
    %1055 = vmatpush1.msra.mxu0 %v955
    %1056 = vmatprep.subr.mxu0 0.0
    %1057 = vmatpush1.msra.mxu0 %v956
    %1058 = vmatprep.subr.mxu0 0.0
    %1059 = vmatpush1.msra.mxu0 %v957
    %1060 = vmatprep.subr.mxu0 0.0
    %1061 = vmatpush1.msra.mxu0 0.0
    %1062 = vmatprep.subr.mxu0 0.0
    %1063 = vmatpush1.msra.mxu0 0.0
    %1064 = vmatprep.subr.mxu0 0.0
    %1065 = vmatpush1.msra.mxu0 0.0
    %1066 = vmatprep.subr.mxu0 0.0
    %1067 = vmatpush1.msra.mxu0 0.0
    %1068 = vmatprep.subr.mxu0 0.0
    %1069 = vmatpush1.msra.mxu0 0.0
    %1070 = vmatprep.subr.mxu0 0.0
    %1071 = vmatpush1.msra.mxu0 0.0
    %1072 = vmatprep.subr.mxu0 0.0
    %1073 = vmatpush1.msra.mxu0 0.0
    %1074 = vmatprep.subr.mxu0 0.0
    %1075 = vmatpush1.msra.mxu0 0.0
    %1076 = vmatprep.subr.mxu0 0.0
    %1077 = vmatpush1.msra.mxu0 0.0
    %1078 = vmatprep.subr.mxu0 0.0
    %1079 = vmatpush1.msra.mxu0 0.0
    %1080 = vmatprep.subr.mxu0 0.0
    %1081 = vmatpush1.msra.mxu0 0.0
    %1082 = vmatprep.subr.mxu0 0.0
    %1083 = vmatpush1.msra.mxu0 0.0
    %1084 = vmatprep.subr.mxu0 0.0
    %1085 = vmatpush1.msra.mxu0 0.0
    %1086 = vmatprep.subr.mxu0 0.0
    %1087 = vmatpush1.msra.mxu0 0.0
    %1088 = vmatprep.subr.mxu0 0.0
    %1089 = vmatpush1.msra.mxu0 0.0
    %1090 = vmatprep.subr.mxu0 0.0
    %1091 = vmatpush1.msra.mxu0 0.0
    %1092 = vmatprep.subr.mxu0 0.0
    %1093 = vmatpush1.msra.mxu0 0.0
    %1094 = vmatprep.subr.mxu0 0.0
    %1095 = vmatpush1.msra.mxu0 0.0
    %1096 = vmatprep.subr.mxu0 0.0
    %1097 = vmatpush1.msra.mxu0 0.0
    %1098 = vmatprep.subr.mxu0 0.0
    %1099 = vmatpush1.msra.mxu0 0.0
    %1100 = vmatprep.subr.mxu0 0.0
    %1101 = vmatpush1.msra.mxu0 0.0
    %1102 = vmatprep.subr.mxu0 0.0
    %1103 = vmatpush1.msra.mxu0 0.0
    %1104 = vmatprep.subr.mxu0 0.0
    %1105 = vmatpush1.msra.mxu0 0.0
    %1106 = vmatprep.subr.mxu0 0.0
    %1107 = vmatpush1.msra.mxu0 0.0
    %1108 = vmatprep.mubr.f32.mxu0 0.0
    %1109 = vmatmul.mubr.f32.gmra.mrb[0].mxu0 %v1042
    %v1110 = vpop.f32.mrb[0].mxu0
    %v1111 = vadd.f32 %v964, %v1110
    %v1112 = vpop.f32.mrb[0].mxu0
    %1113 = vdwg.mxu0
    %v1114 = vld [vmem:[%s13] sm:$0xff]
    %v1115 = vld [vmem:[%s13 + $0x8] sm:$0xff]
    %v1116 = vld [vmem:[%s13 + $0x10] sm:$0xff]
    %v1117 = vld [vmem:[%s13 + $0x18] sm:$0xff]
    %v1118 = vld [vmem:[%s13 + $0x20] sm:$0xff]
    %v1119 = vld [vmem:[%s13 + $0x28] sm:$0xff]
    %v1120 = vld [vmem:[%s13 + $0x30] sm:$0xff]
    %v1121 = vld [vmem:[%s13 + $0x38] sm:$0xff]
    %v1122 = vld [vmem:[%s13 + $0x40] sm:$0xff]
    %v1123 = vld [vmem:[%s13 + $0x48] sm:$0xff]
    %v1124 = vld [vmem:[%s13 + $0x50] sm:$0xff]
    %v1125 = vld [vmem:[%s13 + $0x58] sm:$0xff]
    %v1127 = vsel %vm163, %v1111, 0
    %1129 = vmatprep.subr.mxu0 0.0
    %1130 = vmatpush1.msra.mxu0 %v1118
    %1131 = vmatprep.subr.mxu0 0.0
    %1132 = vmatpush1.msra.mxu0 %v1119
    %1133 = vmatprep.subr.mxu0 0.0
    %1134 = vmatpush1.msra.mxu0 %v1120
    %1135 = vmatprep.subr.mxu0 0.0
    %1136 = vmatpush1.msra.mxu0 %v1121
    %1137 = vmatprep.subr.mxu0 0.0
    %1138 = vmatpush1.msra.mxu0 0.0
    %1139 = vmatprep.subr.mxu0 0.0
    %1140 = vmatpush1.msra.mxu0 0.0
    %1141 = vmatprep.subr.mxu0 0.0
    %1142 = vmatpush1.msra.mxu0 0.0
    %1143 = vmatprep.subr.mxu0 0.0
    %1144 = vmatpush1.msra.mxu0 0.0
    %1145 = vmatprep.subr.mxu0 0.0
    %1146 = vmatpush1.msra.mxu0 0.0
    %1147 = vmatprep.subr.mxu0 0.0
    %1148 = vmatpush1.msra.mxu0 0.0
    %1149 = vmatprep.subr.mxu0 0.0
    %1150 = vmatpush1.msra.mxu0 0.0
    %1151 = vmatprep.subr.mxu0 0.0
    %1152 = vmatpush1.msra.mxu0 0.0
    %1153 = vmatprep.subr.mxu0 0.0
    %1154 = vmatpush1.msra.mxu0 0.0
    %1155 = vmatprep.subr.mxu0 0.0
    %1156 = vmatpush1.msra.mxu0 0.0
    %1157 = vmatprep.subr.mxu0 0.0
    %1158 = vmatpush1.msra.mxu0 0.0
    %1159 = vmatprep.subr.mxu0 0.0
    %1160 = vmatpush1.msra.mxu0 0.0
    %1161 = vmatprep.subr.mxu0 0.0
    %1162 = vmatpush1.msra.mxu0 0.0
    %1163 = vmatprep.subr.mxu0 0.0
    %1164 = vmatpush1.msra.mxu0 0.0
    %1165 = vmatprep.subr.mxu0 0.0
    %1166 = vmatpush1.msra.mxu0 0.0
    %1167 = vmatprep.subr.mxu0 0.0
    %1168 = vmatpush1.msra.mxu0 0.0
    %1169 = vmatprep.subr.mxu0 0.0
    %1170 = vmatpush1.msra.mxu0 0.0
    %1171 = vmatprep.subr.mxu0 0.0
    %1172 = vmatpush1.msra.mxu0 0.0
    %1173 = vmatprep.subr.mxu0 0.0
    %1174 = vmatpush1.msra.mxu0 0.0
    %1175 = vmatprep.subr.mxu0 0.0
    %1176 = vmatpush1.msra.mxu0 0.0
    %1177 = vmatprep.subr.mxu0 0.0
    %1178 = vmatpush1.msra.mxu0 0.0
    %1179 = vmatprep.subr.mxu0 0.0
    %1180 = vmatpush1.msra.mxu0 0.0
    %1181 = vmatprep.subr.mxu0 0.0
    %1182 = vmatpush1.msra.mxu0 0.0
    %1183 = vmatprep.subr.mxu0 0.0
    %1184 = vmatpush1.msra.mxu0 0.0
    %1185 = vmatprep.subr.mxu0 0.0
    %1186 = vmatpush1.msra.mxu0 0.0
    %1187 = vmatprep.subr.mxu0 0.0
    %1188 = vmatpush1.msra.mxu0 0.0
    %1189 = vmatprep.subr.mxu0 0.0
    %1190 = vmatpush1.msra.mxu0 0.0
    %1191 = vmatprep.subr.mxu0 0.0
    %1192 = vmatpush1.msra.mxu0 0.0
    %1193 = vmatprep.mubr.f32.mxu0 0.0
    %1194 = vmatmul.mubr.f32.gmra.mrb[0].mxu0 %v1127
    %v1195 = vpop.f32.mrb[0].mxu0
    %v1196 = vadd.f32 0.0, %v1195
    %v1197 = vpop.f32.mrb[0].mxu0
    %1198 = vdwg.mxu0
    %v1200 = vsel %vm163, %v1037, 0
    %1202 = vmatprep.subr.mxu0 0.0
    %1203 = vmatpush1.msra.mxu0 %v1114
    %1204 = vmatprep.subr.mxu0 0.0
    %1205 = vmatpush1.msra.mxu0 %v1115
    %1206 = vmatprep.subr.mxu0 0.0
    %1207 = vmatpush1.msra.mxu0 %v1116
    %1208 = vmatprep.subr.mxu0 0.0
    %1209 = vmatpush1.msra.mxu0 %v1117
    %1210 = vmatprep.subr.mxu0 0.0
    %1211 = vmatpush1.msra.mxu0 0.0
    %1212 = vmatprep.subr.mxu0 0.0
    %1213 = vmatpush1.msra.mxu0 0.0
    %1214 = vmatprep.subr.mxu0 0.0
    %1215 = vmatpush1.msra.mxu0 0.0
    %1216 = vmatprep.subr.mxu0 0.0
    %1217 = vmatpush1.msra.mxu0 0.0
    %1218 = vmatprep.subr.mxu0 0.0
    %1219 = vmatpush1.msra.mxu0 0.0
    %1220 = vmatprep.subr.mxu0 0.0
    %1221 = vmatpush1.msra.mxu0 0.0
    %1222 = vmatprep.subr.mxu0 0.0
    %1223 = vmatpush1.msra.mxu0 0.0
    %1224 = vmatprep.subr.mxu0 0.0
    %1225 = vmatpush1.msra.mxu0 0.0
    %1226 = vmatprep.subr.mxu0 0.0
    %1227 = vmatpush1.msra.mxu0 0.0
    %1228 = vmatprep.subr.mxu0 0.0
    %1229 = vmatpush1.msra.mxu0 0.0
    %1230 = vmatprep.subr.mxu0 0.0
    %1231 = vmatpush1.msra.mxu0 0.0
    %1232 = vmatprep.subr.mxu0 0.0
    %1233 = vmatpush1.msra.mxu0 0.0
    %1234 = vmatprep.subr.mxu0 0.0
    %1235 = vmatpush1.msra.mxu0 0.0
    %1236 = vmatprep.subr.mxu0 0.0
    %1237 = vmatpush1.msra.mxu0 0.0
    %1238 = vmatprep.subr.mxu0 0.0
    %1239 = vmatpush1.msra.mxu0 0.0
    %1240 = vmatprep.subr.mxu0 0.0
    %1241 = vmatpush1.msra.mxu0 0.0
    %1242 = vmatprep.subr.mxu0 0.0
    %1243 = vmatpush1.msra.mxu0 0.0
    %1244 = vmatprep.subr.mxu0 0.0
    %1245 = vmatpush1.msra.mxu0 0.0
    %1246 = vmatprep.subr.mxu0 0.0
    %1247 = vmatpush1.msra.mxu0 0.0
    %1248 = vmatprep.subr.mxu0 0.0
    %1249 = vmatpush1.msra.mxu0 0.0
    %1250 = vmatprep.subr.mxu0 0.0
    %1251 = vmatpush1.msra.mxu0 0.0
    %1252 = vmatprep.subr.mxu0 0.0
    %1253 = vmatpush1.msra.mxu0 0.0
    %1254 = vmatprep.subr.mxu0 0.0
    %1255 = vmatpush1.msra.mxu0 0.0
    %1256 = vmatprep.subr.mxu0 0.0
    %1257 = vmatpush1.msra.mxu0 0.0
    %1258 = vmatprep.subr.mxu0 0.0
    %1259 = vmatpush1.msra.mxu0 0.0
    %1260 = vmatprep.subr.mxu0 0.0
    %1261 = vmatpush1.msra.mxu0 0.0
    %1262 = vmatprep.subr.mxu0 0.0
    %1263 = vmatpush1.msra.mxu0 0.0
    %1264 = vmatprep.subr.mxu0 0.0
    %1265 = vmatpush1.msra.mxu0 0.0
    %1266 = vmatprep.mubr.f32.mxu0 0.0
    %1267 = vmatmul.mubr.f32.gmra.mrb[0].mxu0 %v1200
    %v1268 = vpop.f32.mrb[0].mxu0
    %v1269 = vadd.f32 %v1196, %v1268
    %v1270 = vpop.f32.mrb[0].mxu0
    %1271 = vdwg.mxu0
    %v1273 = vsel %vm163, %v947, 0
    %1275 = vmatprep.subr.mxu0 0.0
    %1276 = vmatpush1.msra.mxu0 %v1122
    %1277 = vmatprep.subr.mxu0 0.0
    %1278 = vmatpush1.msra.mxu0 %v1123
    %1279 = vmatprep.subr.mxu0 0.0
    %1280 = vmatpush1.msra.mxu0 %v1124
    %1281 = vmatprep.subr.mxu0 0.0
    %1282 = vmatpush1.msra.mxu0 %v1125
    %1283 = vmatprep.subr.mxu0 0.0
    %1284 = vmatpush1.msra.mxu0 0.0
    %1285 = vmatprep.subr.mxu0 0.0
    %1286 = vmatpush1.msra.mxu0 0.0
    %1287 = vmatprep.subr.mxu0 0.0
    %1288 = vmatpush1.msra.mxu0 0.0
    %1289 = vmatprep.subr.mxu0 0.0
    %1290 = vmatpush1.msra.mxu0 0.0
    %1291 = vmatprep.subr.mxu0 0.0
    %1292 = vmatpush1.msra.mxu0 0.0
    %1293 = vmatprep.subr.mxu0 0.0
    %1294 = vmatpush1.msra.mxu0 0.0
    %1295 = vmatprep.subr.mxu0 0.0
    %1296 = vmatpush1.msra.mxu0 0.0
    %1297 = vmatprep.subr.mxu0 0.0
    %1298 = vmatpush1.msra.mxu0 0.0
    %1299 = vmatprep.subr.mxu0 0.0
    %1300 = vmatpush1.msra.mxu0 0.0
    %1301 = vmatprep.subr.mxu0 0.0
    %1302 = vmatpush1.msra.mxu0 0.0
    %1303 = vmatprep.subr.mxu0 0.0
    %1304 = vmatpush1.msra.mxu0 0.0
    %1305 = vmatprep.subr.mxu0 0.0
    %1306 = vmatpush1.msra.mxu0 0.0
    %1307 = vmatprep.subr.mxu0 0.0
    %1308 = vmatpush1.msra.mxu0 0.0
    %1309 = vmatprep.subr.mxu0 0.0
    %1310 = vmatpush1.msra.mxu0 0.0
    %1311 = vmatprep.subr.mxu0 0.0
    %1312 = vmatpush1.msra.mxu0 0.0
    %1313 = vmatprep.subr.mxu0 0.0
    %1314 = vmatpush1.msra.mxu0 0.0
    %1315 = vmatprep.subr.mxu0 0.0
    %1316 = vmatpush1.msra.mxu0 0.0
    %1317 = vmatprep.subr.mxu0 0.0
    %1318 = vmatpush1.msra.mxu0 0.0
    %1319 = vmatprep.subr.mxu0 0.0
    %1320 = vmatpush1.msra.mxu0 0.0
    %1321 = vmatprep.subr.mxu0 0.0
    %1322 = vmatpush1.msra.mxu0 0.0
    %1323 = vmatprep.subr.mxu0 0.0
    %1324 = vmatpush1.msra.mxu0 0.0
    %1325 = vmatprep.subr.mxu0 0.0
    %1326 = vmatpush1.msra.mxu0 0.0
    %1327 = vmatprep.subr.mxu0 0.0
    %1328 = vmatpush1.msra.mxu0 0.0
    %1329 = vmatprep.subr.mxu0 0.0
    %1330 = vmatpush1.msra.mxu0 0.0
    %1331 = vmatprep.subr.mxu0 0.0
    %1332 = vmatpush1.msra.mxu0 0.0
    %1333 = vmatprep.subr.mxu0 0.0
    %1334 = vmatpush1.msra.mxu0 0.0
    %1335 = vmatprep.subr.mxu0 0.0
    %1336 = vmatpush1.msra.mxu0 0.0
    %1337 = vmatprep.subr.mxu0 0.0
    %1338 = vmatpush1.msra.mxu0 0.0
    %1339 = vmatprep.mubr.f32.mxu0 0.0
    %1340 = vmatmul.mubr.f32.gmra.mrb[0].mxu0 %v1273
    %v1341 = vpop.f32.mrb[0].mxu0
    %v1342 = vadd.f32 0.0, %v1341
    %v1343 = vpop.f32.mrb[0].mxu0
    %1344 = vdwg.mxu0
    %v1345 = vadd.f32 %v1269, %v1342
    %v1346 = vld [vmem:[%s14] sm:$0x1]
    %v1348 = vlaneseq
    %v1349 = vshrl.u32 %v1348, 7
    %v1350 = vsub.s32 0, %v1349
    %v1351 = vrot.slane %v1346, %v1350
    %v1353 = vadd.f32 %v1345, %v1351
    %1354 = vrot.lane.b32.xlu0 %v947, 32
    %v1355 = vpop.permute.xlu0 %1354
    %v1357 = vmul.f32 %v1353, %v1355
    %1359 = vrot.lane.b32.xlu0 %v1357, 96
    %v1360 = vpop.permute.xlu0 %1359
    %vm1362 = vcmask 254976
    %v1363 = vsel %vm1362, %v1360, 0.0
    %1364 = vadd.xlane.f32.xlu0 %v1363
    %v1365 = vpop.xlane.xlu0 %1364
    %v1367 = vmul.f32 %v1353, %v314
    %v1368 = vsel %vm1362, %v1367, 0.0
    %1369 = vadd.xlane.f32.xlu0 %v1368
    %v1370 = vpop.xlane.xlu0 %1369
    %v1371 = vadd.f32 %v1370, %v1365
    %v1372 = vmax.f32 %v1371, 1e-08
    %v1373 = vlog2.pop %v1372
    %v1374 = vmul.f32 %v1373, 0.6931472
    %v1375 = vld [vmem:[%s4] sm:$0x3]
    %v1376 = vadd.f32 %v1374, %v1375
    %v1378 = vmul.f32 %v1353, %v463
    %v1379 = vsel %vm1362, %v1378, 0.0
    %1380 = vadd.xlane.f32.xlu0 %v1379
    %v1381 = vpop.xlane.xlu0 %1380
    %v1382 = vadd.f32 %v1381, %v1365
    %v1383 = vmax.f32 %v1382, 1e-08
    %v1384 = vlog2.pop %v1383
    %v1385 = vmul.f32 %v1384, 0.6931472
    %v1386 = vadd.f32 %v1385, %v1375
    %1388 = vrot.lane.b32.xlu0 %v1376, 1
    %v1389 = vpop.permute.xlu0 %1388
    %vm1391 = vcmp.gt.f32.partialorder %v1386, %v1389
    %v1392 = vsel %vm1391, %v1386, %v1389
    %v1393 = vsel %vm1391, 1, 0
    %1394 = vset.pattern.permute.xlu0 1
    %1395 = vperm.xlu0 %1394, %v1393
    %v1396 = vpop.permute.xlu0 %1395
    %vm1397 = vcmp.eq.s32.totalorder %v1396, 1
    %v1398 = vsel %vm1397, %v463, %v314
    %v1400 = vmul.f32 %v1353, %v613
    %v1401 = vsel %vm1362, %v1400, 0.0
    %1402 = vadd.xlane.f32.xlu0 %v1401
    %v1403 = vpop.xlane.xlu0 %1402
    %v1404 = vadd.f32 %v1403, %v1365
    %v1405 = vmax.f32 %v1404, 1e-08
    %v1406 = vlog2.pop %v1405
    %v1407 = vmul.f32 %v1406, 0.6931472
    %v1408 = vadd.f32 %v1407, %v1375
    %1410 = vrot.lane.b32.xlu0 %v1392, 1
    %v1411 = vpop.permute.xlu0 %1410
    %vm1413 = vcmp.gt.f32.partialorder %v1408, %v1411
    %v1414 = vsel %vm1413, %v1408, %v1411
    %v1415 = vsel %vm1413, 1, 0
    %1416 = vset.pattern.permute.xlu0 2
    %1417 = vperm.xlu0 %1416, %v1415
    %v1418 = vpop.permute.xlu0 %1417
    %vm1419 = vcmp.eq.s32.totalorder %v1418, 1
    %v1420 = vsel %vm1419, %v613, %v1398
    %v1422 = vmul.f32 %v1353, %v767
    %v1423 = vsel %vm1362, %v1422, 0.0
    %1424 = vadd.xlane.f32.xlu0 %v1423
    %v1425 = vpop.xlane.xlu0 %1424
    %v1426 = vadd.f32 %v1425, %v1365
    %v1427 = vmax.f32 %v1426, 1e-08
    %v1428 = vlog2.pop %v1427
    %v1429 = vmul.f32 %v1428, 0.6931472
    %v1430 = vadd.f32 %v1429, %v1375
    %1432 = vrot.lane.b32.xlu0 %v1414, 1
    %v1433 = vpop.permute.xlu0 %1432
    %vm1435 = vcmp.gt.f32.partialorder %v1430, %v1433
    %v1436 = vsel %vm1435, 1, 0
    %1437 = vset.pattern.permute.xlu0 3
    %1438 = vperm.xlu0 %1437, %v1436
    %v1439 = vpop.permute.xlu0 %1438
    %vm1440 = vcmp.eq.s32.totalorder %v1439, 1
    %v1441 = vsel %vm1440, %v767, %v1420
    %v1442 = vsel %vm163, %v1441, %v1355
    %v1443 = vld [vmem:[%s15] sm:$0xff]
    %v1444 = vld [vmem:[%s15 + $0x8] sm:$0xff]
    %v1445 = vld [vmem:[%s15 + $0x10] sm:$0xff]
    %v1446 = vld [vmem:[%s15 + $0x18] sm:$0xff]
    %v1447 = vld [vmem:[%s15 + $0x20] sm:$0xff]
    %v1448 = vld [vmem:[%s15 + $0x28] sm:$0xff]
    %v1449 = vld [vmem:[%s15 + $0x30] sm:$0xff]
    %v1450 = vld [vmem:[%s15 + $0x38] sm:$0xff]
    %v1451 = vld [vmem:[%s15 + $0x40] sm:$0xff]
    %v1452 = vld [vmem:[%s15 + $0x48] sm:$0xff]
    %v1453 = vld [vmem:[%s15 + $0x50] sm:$0xff]
    %v1454 = vld [vmem:[%s15 + $0x58] sm:$0xff]
    %v1456 = vsel %vm966, %v1442, 0
    %1458 = vmatprep.subr.mxu0 0.0
    %1459 = vmatpush1.msra.mxu0 %v1447
    %1460 = vmatprep.subr.mxu0 0.0
    %1461 = vmatpush1.msra.mxu0 %v1448
    %1462 = vmatprep.subr.mxu0 0.0
    %1463 = vmatpush1.msra.mxu0 %v1449
    %1464 = vmatprep.subr.mxu0 0.0
    %1465 = vmatpush1.msra.mxu0 %v1450
    %1466 = vmatprep.subr.mxu0 0.0
    %1467 = vmatpush1.msra.mxu0 %v1451
    %1468 = vmatprep.subr.mxu0 0.0
    %1469 = vmatpush1.msra.mxu0 %v1452
    %1470 = vmatprep.subr.mxu0 0.0
    %1471 = vmatpush1.msra.mxu0 %v1453
    %1472 = vmatprep.subr.mxu0 0.0
    %1473 = vmatpush1.msra.mxu0 %v1454
    %1474 = vmatprep.subr.mxu0 0.0
    %1475 = vmatpush1.msra.mxu0 0.0
    %1476 = vmatprep.subr.mxu0 0.0
    %1477 = vmatpush1.msra.mxu0 0.0
    %1478 = vmatprep.subr.mxu0 0.0
    %1479 = vmatpush1.msra.mxu0 0.0
    %1480 = vmatprep.subr.mxu0 0.0
    %1481 = vmatpush1.msra.mxu0 0.0
    %1482 = vmatprep.subr.mxu0 0.0
    %1483 = vmatpush1.msra.mxu0 0.0
    %1484 = vmatprep.subr.mxu0 0.0
    %1485 = vmatpush1.msra.mxu0 0.0
    %1486 = vmatprep.subr.mxu0 0.0
    %1487 = vmatpush1.msra.mxu0 0.0
    %1488 = vmatprep.subr.mxu0 0.0
    %1489 = vmatpush1.msra.mxu0 0.0
    %1490 = vmatprep.subr.mxu0 0.0
    %1491 = vmatpush1.msra.mxu0 0.0
    %1492 = vmatprep.subr.mxu0 0.0
    %1493 = vmatpush1.msra.mxu0 0.0
    %1494 = vmatprep.subr.mxu0 0.0
    %1495 = vmatpush1.msra.mxu0 0.0
    %1496 = vmatprep.subr.mxu0 0.0
    %1497 = vmatpush1.msra.mxu0 0.0
    %1498 = vmatprep.subr.mxu0 0.0
    %1499 = vmatpush1.msra.mxu0 0.0
    %1500 = vmatprep.subr.mxu0 0.0
    %1501 = vmatpush1.msra.mxu0 0.0
    %1502 = vmatprep.subr.mxu0 0.0
    %1503 = vmatpush1.msra.mxu0 0.0
    %1504 = vmatprep.subr.mxu0 0.0
    %1505 = vmatpush1.msra.mxu0 0.0
    %1506 = vmatprep.subr.mxu0 0.0
    %1507 = vmatpush1.msra.mxu0 0.0
    %1508 = vmatprep.subr.mxu0 0.0
    %1509 = vmatpush1.msra.mxu0 0.0
    %1510 = vmatprep.subr.mxu0 0.0
    %1511 = vmatpush1.msra.mxu0 0.0
    %1512 = vmatprep.subr.mxu0 0.0
    %1513 = vmatpush1.msra.mxu0 0.0
    %1514 = vmatprep.subr.mxu0 0.0
    %1515 = vmatpush1.msra.mxu0 0.0
    %1516 = vmatprep.subr.mxu0 0.0
    %1517 = vmatpush1.msra.mxu0 0.0
    %1518 = vmatprep.subr.mxu0 0.0
    %1519 = vmatpush1.msra.mxu0 0.0
    %1520 = vmatprep.subr.mxu0 0.0
    %1521 = vmatpush1.msra.mxu0 0.0
    %1522 = vmatprep.mubr.f32.mxu0 0.0
    %1523 = vmatmul.mubr.f32.gmra.mrb[0].mxu0 %v1456
    %v1524 = vpop.f32.mrb[0].mxu0
    %v1525 = vadd.f32 0.0, %v1524
    %v1526 = vpop.f32.mrb[0].mxu0
    %1527 = vdwg.mxu0
    %1528 = vmatprep.subr.mxu0 0.0
    %1529 = vmatpush1.msra.mxu0 %v1443
    %1530 = vmatprep.subr.mxu0 0.0
    %1531 = vmatpush1.msra.mxu0 %v1444
    %1532 = vmatprep.subr.mxu0 0.0
    %1533 = vmatpush1.msra.mxu0 %v1445
    %1534 = vmatprep.subr.mxu0 0.0
    %1535 = vmatpush1.msra.mxu0 %v1446
    %1536 = vmatprep.subr.mxu0 0.0
    %1537 = vmatpush1.msra.mxu0 0.0
    %1538 = vmatprep.subr.mxu0 0.0
    %1539 = vmatpush1.msra.mxu0 0.0
    %1540 = vmatprep.subr.mxu0 0.0
    %1541 = vmatpush1.msra.mxu0 0.0
    %1542 = vmatprep.subr.mxu0 0.0
    %1543 = vmatpush1.msra.mxu0 0.0
    %1544 = vmatprep.subr.mxu0 0.0
    %1545 = vmatpush1.msra.mxu0 0.0
    %1546 = vmatprep.subr.mxu0 0.0
    %1547 = vmatpush1.msra.mxu0 0.0
    %1548 = vmatprep.subr.mxu0 0.0
    %1549 = vmatpush1.msra.mxu0 0.0
    %1550 = vmatprep.subr.mxu0 0.0
    %1551 = vmatpush1.msra.mxu0 0.0
    %1552 = vmatprep.subr.mxu0 0.0
    %1553 = vmatpush1.msra.mxu0 0.0
    %1554 = vmatprep.subr.mxu0 0.0
    %1555 = vmatpush1.msra.mxu0 0.0
    %1556 = vmatprep.subr.mxu0 0.0
    %1557 = vmatpush1.msra.mxu0 0.0
    %1558 = vmatprep.subr.mxu0 0.0
    %1559 = vmatpush1.msra.mxu0 0.0
    %1560 = vmatprep.subr.mxu0 0.0
    %1561 = vmatpush1.msra.mxu0 0.0
    %1562 = vmatprep.subr.mxu0 0.0
    %1563 = vmatpush1.msra.mxu0 0.0
    %1564 = vmatprep.subr.mxu0 0.0
    %1565 = vmatpush1.msra.mxu0 0.0
    %1566 = vmatprep.subr.mxu0 0.0
    %1567 = vmatpush1.msra.mxu0 0.0
    %1568 = vmatprep.subr.mxu0 0.0
    %1569 = vmatpush1.msra.mxu0 0.0
    %1570 = vmatprep.subr.mxu0 0.0
    %1571 = vmatpush1.msra.mxu0 0.0
    %1572 = vmatprep.subr.mxu0 0.0
    %1573 = vmatpush1.msra.mxu0 0.0
    %1574 = vmatprep.subr.mxu0 0.0
    %1575 = vmatpush1.msra.mxu0 0.0
    %1576 = vmatprep.subr.mxu0 0.0
    %1577 = vmatpush1.msra.mxu0 0.0
    %1578 = vmatprep.subr.mxu0 0.0
    %1579 = vmatpush1.msra.mxu0 0.0
    %1580 = vmatprep.subr.mxu0 0.0
    %1581 = vmatpush1.msra.mxu0 0.0
    %1582 = vmatprep.subr.mxu0 0.0
    %1583 = vmatpush1.msra.mxu0 0.0
    %1584 = vmatprep.subr.mxu0 0.0
    %1585 = vmatpush1.msra.mxu0 0.0
    %1586 = vmatprep.subr.mxu0 0.0
    %1587 = vmatpush1.msra.mxu0 0.0
    %1588 = vmatprep.subr.mxu0 0.0
    %1589 = vmatpush1.msra.mxu0 0.0
    %1590 = vmatprep.subr.mxu0 0.0
    %1591 = vmatpush1.msra.mxu0 0.0
    %1592 = vmatprep.mubr.f32.mxu0 0.0
    %1593 = vmatmul.mubr.f32.gmra.mrb[0].mxu0 %v1200
    %v1594 = vpop.f32.mrb[0].mxu0
    %v1595 = vadd.f32 %v1525, %v1594
    %v1596 = vpop.f32.mrb[0].mxu0
    %1597 = vdwg.mxu0
    %v1598 = vld [vmem:[%s16] sm:$0x1]
    %v1600 = vlaneseq
    %v1601 = vshrl.u32 %v1600, 7
    %v1602 = vsub.s32 0, %v1601
    %v1603 = vrot.slane %v1598, %v1602
    %v1605 = vadd.f32 %v1595, %v1603
    %1606 = vrot.lane.b32.xlu0 %v1111, 32
    %v1607 = vpop.permute.xlu0 %1606
    %v1609 = vsel %vm163, %v1037, %v1607
    %v1610 = vmul.f32 %v1605, %v1609
    %vm1611 = vcmask 517120
    %v1612 = vsel %vm1611, %v1610, 0.0
    %1613 = vadd.xlane.f32.xlu0 %v1612
    %v1614 = vpop.xlane.xlu0 %1613
    %v1615 = vmul.f32 %v1605, %v1442
    %v1616 = vsel %vm1611, %v1615, 0.0
    %1617 = vadd.xlane.f32.xlu0 %v1616
    %v1618 = vpop.xlane.xlu0 %1617
    %v1619 = vmax.f32 %v1614, 1e-08
    %v1620 = vlog2.pop %v1619
    %v1621 = vmul.f32 %v1620, 0.6931472
    %v1622 = vld [vmem:[%s5] sm:$0x3]
    %v1623 = vadd.f32 %v1621, %v1622
    %v1624 = vmax.f32 %v1618, 1e-08
    %v1625 = vlog2.pop %v1624
    %v1626 = vmul.f32 %v1625, 0.6931472
    %v1627 = vadd.f32 %v1626, %v1622
    %1629 = vrot.lane.b32.xlu0 %v1623, 1
    %v1630 = vpop.permute.xlu0 %1629
    %vm1632 = vcmp.gt.f32.partialorder %v1627, %v1630
    %v1633 = vsel %vm1632, 1, 0
    %1634 = vset.pattern.permute.xlu0 1
    %1635 = vperm.xlu0 %1634, %v1633
    %v1636 = vpop.permute.xlu0 %1635
    %vm1637 = vcmp.eq.s32.totalorder %v1636, 1
    %v1638 = vsel %vm1637, %v1442, %v1609
    %v1639 = vld [vmem:[%s17] sm:$0xff]
    %v1640 = vld [vmem:[%s17 + $0x8] sm:$0xff]
    %v1641 = vld [vmem:[%s17 + $0x10] sm:$0xff]
    %v1642 = vld [vmem:[%s17 + $0x18] sm:$0xff]
    %v1643 = vld [vmem:[%s17 + $0x20] sm:$0xff]
    %v1644 = vld [vmem:[%s17 + $0x28] sm:$0xff]
    %v1645 = vld [vmem:[%s17 + $0x30] sm:$0xff]
    %v1646 = vld [vmem:[%s17 + $0x38] sm:$0xff]
    %v1647 = vld [vmem:[%s18] sm:$0x1]
    %v1649 = vlaneseq
    %v1650 = vshrl.u32 %v1649, 7
    %v1651 = vsub.s32 0, %v1650
    %v1652 = vrot.slane %v1647, %v1651
    %v1655 = vsel %vm966, %v1638, 0
    %1657 = vmatprep.subr.mxu0 0.0
    %1658 = vmatpush1.msra.mxu0 %v1639
    %1659 = vmatprep.subr.mxu0 0.0
    %1660 = vmatpush1.msra.mxu0 %v1640
    %1661 = vmatprep.subr.mxu0 0.0
    %1662 = vmatpush1.msra.mxu0 %v1641
    %1663 = vmatprep.subr.mxu0 0.0
    %1664 = vmatpush1.msra.mxu0 %v1642
    %1665 = vmatprep.subr.mxu0 0.0
    %1666 = vmatpush1.msra.mxu0 %v1643
    %1667 = vmatprep.subr.mxu0 0.0
    %1668 = vmatpush1.msra.mxu0 %v1644
    %1669 = vmatprep.subr.mxu0 0.0
    %1670 = vmatpush1.msra.mxu0 %v1645
    %1671 = vmatprep.subr.mxu0 0.0
    %1672 = vmatpush1.msra.mxu0 %v1646
    %1673 = vmatprep.subr.mxu0 0.0
    %1674 = vmatpush1.msra.mxu0 0.0
    %1675 = vmatprep.subr.mxu0 0.0
    %1676 = vmatpush1.msra.mxu0 0.0
    %1677 = vmatprep.subr.mxu0 0.0
    %1678 = vmatpush1.msra.mxu0 0.0
    %1679 = vmatprep.subr.mxu0 0.0
    %1680 = vmatpush1.msra.mxu0 0.0
    %1681 = vmatprep.subr.mxu0 0.0
    %1682 = vmatpush1.msra.mxu0 0.0
    %1683 = vmatprep.subr.mxu0 0.0
    %1684 = vmatpush1.msra.mxu0 0.0
    %1685 = vmatprep.subr.mxu0 0.0
    %1686 = vmatpush1.msra.mxu0 0.0
    %1687 = vmatprep.subr.mxu0 0.0
    %1688 = vmatpush1.msra.mxu0 0.0
    %1689 = vmatprep.subr.mxu0 0.0
    %1690 = vmatpush1.msra.mxu0 0.0
    %1691 = vmatprep.subr.mxu0 0.0
    %1692 = vmatpush1.msra.mxu0 0.0
    %1693 = vmatprep.subr.mxu0 0.0
    %1694 = vmatpush1.msra.mxu0 0.0
    %1695 = vmatprep.subr.mxu0 0.0
    %1696 = vmatpush1.msra.mxu0 0.0
    %1697 = vmatprep.subr.mxu0 0.0
    %1698 = vmatpush1.msra.mxu0 0.0
    %1699 = vmatprep.subr.mxu0 0.0
    %1700 = vmatpush1.msra.mxu0 0.0
    %1701 = vmatprep.subr.mxu0 0.0
    %1702 = vmatpush1.msra.mxu0 0.0
    %1703 = vmatprep.subr.mxu0 0.0
    %1704 = vmatpush1.msra.mxu0 0.0
    %1705 = vmatprep.subr.mxu0 0.0
    %1706 = vmatpush1.msra.mxu0 0.0
    %1707 = vmatprep.subr.mxu0 0.0
    %1708 = vmatpush1.msra.mxu0 0.0
    %1709 = vmatprep.subr.mxu0 0.0
    %1710 = vmatpush1.msra.mxu0 0.0
    %1711 = vmatprep.subr.mxu0 0.0
    %1712 = vmatpush1.msra.mxu0 0.0
    %1713 = vmatprep.subr.mxu0 0.0
    %1714 = vmatpush1.msra.mxu0 0.0
    %1715 = vmatprep.subr.mxu0 0.0
    %1716 = vmatpush1.msra.mxu0 0.0
    %1717 = vmatprep.subr.mxu0 0.0
    %1718 = vmatpush1.msra.mxu0 0.0
    %1719 = vmatprep.subr.mxu0 0.0
    %1720 = vmatpush1.msra.mxu0 0.0
    %1721 = vmatprep.mubr.f32.mxu0 0.0
    %1722 = vmatmul.mubr.f32.gmra.mrb[0].mxu0 %v1655
    %v1723 = vpop.f32.mrb[0].mxu0
    %v1724 = vadd.f32 %v1652, %v1723
    %v1725 = vpop.f32.mrb[0].mxu0
    %1726 = vdwg.mxu0
    %1727 = vst [vmem:[#allocation2] sm:$0x3] %v1724
    // Predicated region
    $region78: #{gcm_forward.3} parent=1 // pred_check
      _
    $region79: #{gcm_forward.3} parent=1 // pred_check_branch
      %1729 = sbr.rel (0) target = $region81
    $region80: #{gcm_forward.3} parent=1 // pred_region
      %s1731 = ssub.s32 32, 32
      %1732 = vsyncadd [#allocation3], %s1731
      %s1734 = sshll.u32 [#allocation2], 4
      %s1735 = int_to_ptr.vmem [resolvable:$true] %s1734
      %1737 = dma.vmem_to_hbm [thread:$0]  %s1735, 32, %s19, [#allocation3]
    $region81: #{gcm_forward.3} parent=1 // pred_fallthru
      _
    // Predicated region
    $region82: #{gcm_forward.3} parent=1 // pred_check
      _
    $region83: #{gcm_forward.3} parent=1 // pred_check_branch
      %1739 = sbr.rel (0) target = $region85
    $region84: #{gcm_forward.3} parent=1 // pred_region
      %1740 = dma.done [#allocation3], 32
    $region85: #{gcm_forward.3} parent=1 // pred_fallthru
      _
    %1741 = vsyncpa [#allocation3], 1

</llo_original>
